<compile_context>
chip_gen: v6e
topology: v6e:2x2x1
jax: 0.10.0
libtpu: 0.0.40
codegen_flags: <defaults>
</compile_context>

<pallas_src>
import functools

import jax
import jax.numpy as jnp
from jax.experimental import pallas as pl
from jax.experimental.pallas import tpu as pltpu


# --------------------------------- kernel -----------------------------------

def _med_convblock_kernel(x_ref, w1_ref, b1_ref, w2_ref, b2_ref,
                          w3_ref, b3_ref, mask_ref, o_ref, *, H, W):
    """One batch element: x_ref (1, Cin, H*W) -> o_ref (1, Cin, H*W)."""
    med = w1_ref.shape[0]
    HW = H * W

    x = x_ref[0]                                             # (Cin, HW) f32 (residual)

    # ---- conv1 (1x1, BN scale folded into weight) + shift + ReLU ------------
    h1 = jnp.dot(w1_ref[...], x, preferred_element_type=jnp.float32)  # (med, HW)
    h1 = jnp.maximum(h1 + b1_ref[...], 0.0)

    # ---- conv2 (3x3, padding=1): 9 lane-shifted, border-masked MXU dots -----
    zpad = jnp.zeros((med, W + 1), jnp.float32)
    h1p = jnp.concatenate([zpad, h1, zpad], axis=1)          # (med, HW + 2W + 2)
    mask = mask_ref[...]                                     # (9, HW) {0,1} f32

    acc = jnp.zeros((med, HW), jnp.float32)
    for t in range(9):                                       # static unroll
        dy, dx = t // 3 - 1, t % 3 - 1
        off = (W + 1) + dy * W + dx                          # static lane offset
        tap = h1p[:, off:off + HW] * mask[t:t + 1, :]        # h1[y+dy, x+dx] or 0
        acc = acc + jnp.dot(w2_ref[t], tap,
                            preferred_element_type=jnp.float32)
    h2 = jnp.maximum(acc + b2_ref[...], 0.0)                 # (med, HW)

    # ---- conv3 (1x1) + BN shift + residual + ReLU ---------------------------
    h3 = jnp.dot(w3_ref[...], h2, preferred_element_type=jnp.float32)  # (Cin, HW)
    o_ref[0] = jnp.maximum(h3 + b3_ref[...] + x, 0.0)


# --------------------------------- wrapper ----------------------------------

def _bn_fold(bn, eps=1e-6):
    """Fold BatchNorm2d (eval mode) into per-channel (scale, shift)."""
    gamma, beta, mean, var = bn
    scale = gamma / jnp.sqrt(var + eps)      # PyTorch BN: eps inside the sqrt
    shift = beta - mean * scale
    return scale, shift


def _border_masks(H, W):
    """(9, H*W) f32: mask[t, y*W + x] = 1 iff pixel (y+dy, x+dx) is in-bounds."""
    yy = jnp.repeat(jnp.arange(H), W)        # y index per flat position
    xx = jnp.tile(jnp.arange(W), H)          # x index per flat position
    rows = []
    for t in range(9):
        dy, dx = t // 3 - 1, t % 3 - 1
        valid = ((yy + dy >= 0) & (yy + dy < H) &
                 (xx + dx >= 0) & (xx + dx < W))
        rows.append(valid.astype(jnp.float32))
    return jnp.stack(rows, axis=0)


@jax.jit
def med_conv_block_forward(params, x_nchw):
    """Med_ConvBlock forward.  x_nchw: (B, inplanes, H, W) float32."""
    B, C, H, W = x_nchw.shape
    med = params["conv1_w"].shape[0]
    HW = H * W

    # -- host-side (trace-time) weight prep: layout + BN folding --------------
    s1, b1 = _bn_fold(params["bn1"])
    s2, b2 = _bn_fold(params["bn2"])
    s3, b3 = _bn_fold(params["bn3"])

    w1 = params["conv1_w"].reshape(med, C) * s1[:, None]                 # (med, Cin)
    # conv2 weight (O, I, 3, 3) -> (9, O, I), tap t = ky*3 + kx
    w2 = jnp.transpose(params["conv2_w"], (2, 3, 0, 1)).reshape(9, med, med)
    w2 = w2 * s2[None, :, None]
    w3 = params["conv3_w"].reshape(C, med) * s3[:, None]                 # (Cin, med)
    mask = _border_masks(H, W)                                           # (9, HW)

    x2 = x_nchw.reshape(B, C, HW).astype(jnp.float32)

    out = pl.pallas_call(
        functools.partial(_med_convblock_kernel, H=H, W=W),
        grid=(B,),
        in_specs=[
            pl.BlockSpec((1, C, HW), lambda b: (b, 0, 0)),       # x (lane-dense)
            pl.BlockSpec((med, C), lambda b: (0, 0)),            # w1 (resident)
            pl.BlockSpec((med, 1), lambda b: (0, 0)),            # bn1 shift
            pl.BlockSpec((9, med, med), lambda b: (0, 0, 0)),    # w2 taps
            pl.BlockSpec((med, 1), lambda b: (0, 0)),            # bn2 shift
            pl.BlockSpec((C, med), lambda b: (0, 0)),            # w3
            pl.BlockSpec((C, 1), lambda b: (0, 0)),              # bn3 shift
            pl.BlockSpec((9, HW), lambda b: (0, 0)),             # border masks
        ],
        out_specs=pl.BlockSpec((1, C, HW), lambda b: (b, 0, 0)),
        out_shape=jax.ShapeDtypeStruct((B, C, HW), jnp.float32),
        compiler_params=pltpu.CompilerParams(
            dimension_semantics=("parallel",)),                  # megacore over batch
    )(
        x2,
        w1, b1.reshape(med, 1),
        w2, b2.reshape(med, 1),
        w3, b3.reshape(C, 1),
        mask,
    )
    return out.reshape(B, C, H, W)


# ------------------------------ pure-JAX reference ---------------------------

def _reference(params, x, eps=1e-6):
    def bn(h, p):
        g, b, m, v = p
        s = g / jnp.sqrt(v + eps)
        return h * s[None, :, None, None] + (b - m * s)[None, :, None, None]

    dn = ("NCHW", "OIHW", "NCHW")
    hp = jax.lax.Precision.HIGHEST
    h = jax.lax.conv_general_dilated(x, params["conv1_w"], (1, 1), "VALID",
                                     dimension_numbers=dn, precision=hp)
    h = jax.nn.relu(bn(h, params["bn1"]))
    h = jax.lax.conv_general_dilated(h, params["conv2_w"], (1, 1),
                                     ((1, 1), (1, 1)),
                                     dimension_numbers=dn, precision=hp)
    h = jax.nn.relu(bn(h, params["bn2"]))
    h = jax.lax.conv_general_dilated(h, params["conv3_w"], (1, 1), "VALID",
                                     dimension_numbers=dn, precision=hp)
    h = bn(h, params["bn3"])
    return jax.nn.relu(h + x)


# ----------------------------------- main ------------------------------------

if __name__ == "__main__":
    key = jax.random.PRNGKey(0)
    keys = jax.random.split(key, 8)

    # Med_ConvBlock(inplanes=16): med_planes = inplanes // 4 = 4
    B, inplanes, H, W = 2, 16, 16, 16
    med = inplanes // 4

    def bn_init(k, c):
        k1, k2, k3, k4 = jax.random.split(k, 4)
        return (1.0 + 0.05 * jax.random.normal(k1, (c,), jnp.float32),   # gamma
                0.05 * jax.random.normal(k2, (c,), jnp.float32),         # beta
                0.05 * jax.random.normal(k3, (c,), jnp.float32),         # running_mean
                0.9 + 0.2 * jax.random.uniform(k4, (c,), jnp.float32))   # running_var

    params = dict(
        conv1_w=0.3 * jax.random.normal(keys[0], (med, inplanes, 1, 1), jnp.float32),
        bn1=bn_init(keys[1], med),
        conv2_w=0.3 * jax.random.normal(keys[2], (med, med, 3, 3), jnp.float32),
        bn2=bn_init(keys[3], med),
        conv3_w=0.3 * jax.random.normal(keys[4], (inplanes, med, 1, 1), jnp.float32),
        bn3=bn_init(keys[5], inplanes),
    )
    x = jax.random.normal(keys[6], (B, inplanes, H, W), jnp.float32)

    out = med_conv_block_forward(params, x)
    jax.block_until_ready(out)

    ref = _reference(params, x)
    err = float(jnp.max(jnp.abs(out - ref)))

    assert out.shape == (B, inplanes, H, W)
    assert jnp.all(jnp.isfinite(out))
    assert err < 5e-2, f"max |kernel - reference| = {err}"
    print("KERNEL_OK")
</pallas_src>

<mosaic_0001>
module attributes {stable_mosaic.version = 11 : i64} {
  func.func @_med_convblock_kernel(%arg0: i32, %arg1: memref<1x16x256xf32, #tpu.memory_space<vmem>>, %arg2: memref<4x16xf32, #tpu.memory_space<vmem>>, %arg3: memref<4x1xf32, #tpu.memory_space<vmem>>, %arg4: memref<9x4x4xf32, #tpu.memory_space<vmem>>, %arg5: memref<4x1xf32, #tpu.memory_space<vmem>>, %arg6: memref<16x4xf32, #tpu.memory_space<vmem>>, %arg7: memref<16x1xf32, #tpu.memory_space<vmem>>, %arg8: memref<9x256xf32, #tpu.memory_space<vmem>>, %arg9: memref<1x16x256xf32, #tpu.memory_space<vmem>>) attributes {dimension_semantics = [#tpu.dimension_semantics<parallel>], iteration_bounds = array<i64: 2>, scalar_prefetch = 0 : i64, scratch_operands = 0 : i64, tpu.core_type = #tpu.core_type<tc>, window_params = [{transform_indices = @transform_0, window_bounds = array<i64: 1, 16, 256>}, {pipeline_mode = #tpu.pipeline_mode<synchronous>, transform_indices = @transform_1, window_bounds = array<i64: 4, 16>}, {pipeline_mode = #tpu.pipeline_mode<synchronous>, transform_indices = @transform_2, window_bounds = array<i64: 4, 1>}, {pipeline_mode = #tpu.pipeline_mode<synchronous>, transform_indices = @transform_3, window_bounds = array<i64: 9, 4, 4>}, {pipeline_mode = #tpu.pipeline_mode<synchronous>, transform_indices = @transform_4, window_bounds = array<i64: 4, 1>}, {pipeline_mode = #tpu.pipeline_mode<synchronous>, transform_indices = @transform_5, window_bounds = array<i64: 16, 4>}, {pipeline_mode = #tpu.pipeline_mode<synchronous>, transform_indices = @transform_6, window_bounds = array<i64: 16, 1>}, {pipeline_mode = #tpu.pipeline_mode<synchronous>, transform_indices = @transform_7, window_bounds = array<i64: 9, 256>}, {transform_indices = @transform_8, window_bounds = array<i64: 1, 16, 256>}]} {
    %c0 = arith.constant 0 : index
    %c0_0 = arith.constant 0 : index
    %c0_1 = arith.constant 0 : index
    %0 = vector.load %arg1[%c0, %c0_0, %c0_1] : memref<1x16x256xf32, #tpu.memory_space<vmem>>, vector<1x16x256xf32>
    %1 = vector.shape_cast %0 : vector<1x16x256xf32> to vector<16x256xf32>
    %c0_2 = arith.constant 0 : index
    %c0_3 = arith.constant 0 : index
    %2 = vector.load %arg2[%c0_2, %c0_3] : memref<4x16xf32, #tpu.memory_space<vmem>>, vector<4x16xf32>
    %cst = arith.constant dense<0.000000e+00> : vector<4x256xf32>
    %3 = tpu.matmul %2, %1, %cst {dimension_numbers = #tpu.dot_dimension_numbers<[1], [0], [0], [1], [0, 0, 1, 1], [], []>} : vector<4x16xf32>, vector<16x256xf32>, vector<4x256xf32> -> vector<4x256xf32>
    %c0_4 = arith.constant 0 : index
    %c0_5 = arith.constant 0 : index
    %4 = vector.load %arg3[%c0_4, %c0_5] : memref<4x1xf32, #tpu.memory_space<vmem>>, vector<4x1xf32>
    %5 = vector.broadcast %4 : vector<4x1xf32> to vector<4x256xf32>
    %6 = arith.addf %3, %5 : vector<4x256xf32>
    %cst_6 = arith.constant 0.000000e+00 : f32
    %7 = vector.broadcast %cst_6 : f32 to vector<4x256xf32>
    %8 = arith.maximumf %6, %7 : vector<4x256xf32>
    %cst_7 = arith.constant 0.000000e+00 : f32
    %9 = vector.broadcast %cst_7 : f32 to vector<4x17xf32>
    %10 = tpu.concatenate %9, %8, %9 in 1 : vector<4x17xf32>, vector<4x256xf32>, vector<4x17xf32> -> vector<4x290xf32>
    %c0_8 = arith.constant 0 : index
    %c0_9 = arith.constant 0 : index
    %11 = vector.load %arg8[%c0_8, %c0_9] : memref<9x256xf32, #tpu.memory_space<vmem>>, vector<9x256xf32>
    %cst_10 = arith.constant 0.000000e+00 : f32
    %12 = vector.broadcast %cst_10 : f32 to vector<4x256xf32>
    %13 = vector.extract_strided_slice %10 {offsets = [0, 0], sizes = [4, 256], strides = [1, 1]} : vector<4x290xf32> to vector<4x256xf32>
    %14 = vector.extract_strided_slice %11 {offsets = [0, 0], sizes = [1, 256], strides = [1, 1]} : vector<9x256xf32> to vector<1x256xf32>
    %15 = vector.broadcast %14 : vector<1x256xf32> to vector<4x256xf32>
    %16 = arith.mulf %13, %15 : vector<4x256xf32>
    %c0_11 = arith.constant 0 : index
    %c0_12 = arith.constant 0 : index
    %c0_13 = arith.constant 0 : index
    %17 = vector.load %arg4[%c0_11, %c0_12, %c0_13] : memref<9x4x4xf32, #tpu.memory_space<vmem>>, vector<1x4x4xf32>
    %18 = vector.shape_cast %17 : vector<1x4x4xf32> to vector<4x4xf32>
    %cst_14 = arith.constant dense<0.000000e+00> : vector<4x256xf32>
    %19 = tpu.matmul %18, %16, %cst_14 {dimension_numbers = #tpu.dot_dimension_numbers<[1], [0], [0], [1], [0, 0, 1, 1], [], []>} : vector<4x4xf32>, vector<4x256xf32>, vector<4x256xf32> -> vector<4x256xf32>
    %20 = arith.addf %12, %19 : vector<4x256xf32>
    %21 = vector.extract_strided_slice %10 {offsets = [0, 1], sizes = [4, 256], strides = [1, 1]} : vector<4x290xf32> to vector<4x256xf32>
    %22 = vector.extract_strided_slice %11 {offsets = [1, 0], sizes = [1, 256], strides = [1, 1]} : vector<9x256xf32> to vector<1x256xf32>
    %23 = vector.broadcast %22 : vector<1x256xf32> to vector<4x256xf32>
    %24 = arith.mulf %21, %23 : vector<4x256xf32>
    %c1 = arith.constant 1 : index
    %c0_15 = arith.constant 0 : index
    %c0_16 = arith.constant 0 : index
    %25 = vector.load %arg4[%c1, %c0_15, %c0_16] : memref<9x4x4xf32, #tpu.memory_space<vmem>>, vector<1x4x4xf32>
    %26 = vector.shape_cast %25 : vector<1x4x4xf32> to vector<4x4xf32>
    %cst_17 = arith.constant dense<0.000000e+00> : vector<4x256xf32>
    %27 = tpu.matmul %26, %24, %cst_17 {dimension_numbers = #tpu.dot_dimension_numbers<[1], [0], [0], [1], [0, 0, 1, 1], [], []>} : vector<4x4xf32>, vector<4x256xf32>, vector<4x256xf32> -> vector<4x256xf32>
    %28 = arith.addf %20, %27 : vector<4x256xf32>
    %29 = vector.extract_strided_slice %10 {offsets = [0, 2], sizes = [4, 256], strides = [1, 1]} : vector<4x290xf32> to vector<4x256xf32>
    %30 = vector.extract_strided_slice %11 {offsets = [2, 0], sizes = [1, 256], strides = [1, 1]} : vector<9x256xf32> to vector<1x256xf32>
    %31 = vector.broadcast %30 : vector<1x256xf32> to vector<4x256xf32>
    %32 = arith.mulf %29, %31 : vector<4x256xf32>
    %c2 = arith.constant 2 : index
    %c0_18 = arith.constant 0 : index
    %c0_19 = arith.constant 0 : index
    %33 = vector.load %arg4[%c2, %c0_18, %c0_19] : memref<9x4x4xf32, #tpu.memory_space<vmem>>, vector<1x4x4xf32>
    %34 = vector.shape_cast %33 : vector<1x4x4xf32> to vector<4x4xf32>
    %cst_20 = arith.constant dense<0.000000e+00> : vector<4x256xf32>
    %35 = tpu.matmul %34, %32, %cst_20 {dimension_numbers = #tpu.dot_dimension_numbers<[1], [0], [0], [1], [0, 0, 1, 1], [], []>} : vector<4x4xf32>, vector<4x256xf32>, vector<4x256xf32> -> vector<4x256xf32>
    %36 = arith.addf %28, %35 : vector<4x256xf32>
    %37 = vector.extract_strided_slice %10 {offsets = [0, 16], sizes = [4, 256], strides = [1, 1]} : vector<4x290xf32> to vector<4x256xf32>
    %38 = vector.extract_strided_slice %11 {offsets = [3, 0], sizes = [1, 256], strides = [1, 1]} : vector<9x256xf32> to vector<1x256xf32>
    %39 = vector.broadcast %38 : vector<1x256xf32> to vector<4x256xf32>
    %40 = arith.mulf %37, %39 : vector<4x256xf32>
    %c3 = arith.constant 3 : index
    %c0_21 = arith.constant 0 : index
    %c0_22 = arith.constant 0 : index
    %41 = vector.load %arg4[%c3, %c0_21, %c0_22] : memref<9x4x4xf32, #tpu.memory_space<vmem>>, vector<1x4x4xf32>
    %42 = vector.shape_cast %41 : vector<1x4x4xf32> to vector<4x4xf32>
    %cst_23 = arith.constant dense<0.000000e+00> : vector<4x256xf32>
    %43 = tpu.matmul %42, %40, %cst_23 {dimension_numbers = #tpu.dot_dimension_numbers<[1], [0], [0], [1], [0, 0, 1, 1], [], []>} : vector<4x4xf32>, vector<4x256xf32>, vector<4x256xf32> -> vector<4x256xf32>
    %44 = arith.addf %36, %43 : vector<4x256xf32>
    %45 = vector.extract_strided_slice %10 {offsets = [0, 17], sizes = [4, 256], strides = [1, 1]} : vector<4x290xf32> to vector<4x256xf32>
    %46 = vector.extract_strided_slice %11 {offsets = [4, 0], sizes = [1, 256], strides = [1, 1]} : vector<9x256xf32> to vector<1x256xf32>
    %47 = vector.broadcast %46 : vector<1x256xf32> to vector<4x256xf32>
    %48 = arith.mulf %45, %47 : vector<4x256xf32>
    %c4 = arith.constant 4 : index
    %c0_24 = arith.constant 0 : index
    %c0_25 = arith.constant 0 : index
    %49 = vector.load %arg4[%c4, %c0_24, %c0_25] : memref<9x4x4xf32, #tpu.memory_space<vmem>>, vector<1x4x4xf32>
    %50 = vector.shape_cast %49 : vector<1x4x4xf32> to vector<4x4xf32>
    %cst_26 = arith.constant dense<0.000000e+00> : vector<4x256xf32>
    %51 = tpu.matmul %50, %48, %cst_26 {dimension_numbers = #tpu.dot_dimension_numbers<[1], [0], [0], [1], [0, 0, 1, 1], [], []>} : vector<4x4xf32>, vector<4x256xf32>, vector<4x256xf32> -> vector<4x256xf32>
    %52 = arith.addf %44, %51 : vector<4x256xf32>
    %53 = vector.extract_strided_slice %10 {offsets = [0, 18], sizes = [4, 256], strides = [1, 1]} : vector<4x290xf32> to vector<4x256xf32>
    %54 = vector.extract_strided_slice %11 {offsets = [5, 0], sizes = [1, 256], strides = [1, 1]} : vector<9x256xf32> to vector<1x256xf32>
    %55 = vector.broadcast %54 : vector<1x256xf32> to vector<4x256xf32>
    %56 = arith.mulf %53, %55 : vector<4x256xf32>
    %c5 = arith.constant 5 : index
    %c0_27 = arith.constant 0 : index
    %c0_28 = arith.constant 0 : index
    %57 = vector.load %arg4[%c5, %c0_27, %c0_28] : memref<9x4x4xf32, #tpu.memory_space<vmem>>, vector<1x4x4xf32>
    %58 = vector.shape_cast %57 : vector<1x4x4xf32> to vector<4x4xf32>
    %cst_29 = arith.constant dense<0.000000e+00> : vector<4x256xf32>
    %59 = tpu.matmul %58, %56, %cst_29 {dimension_numbers = #tpu.dot_dimension_numbers<[1], [0], [0], [1], [0, 0, 1, 1], [], []>} : vector<4x4xf32>, vector<4x256xf32>, vector<4x256xf32> -> vector<4x256xf32>
    %60 = arith.addf %52, %59 : vector<4x256xf32>
    %61 = vector.extract_strided_slice %10 {offsets = [0, 32], sizes = [4, 256], strides = [1, 1]} : vector<4x290xf32> to vector<4x256xf32>
    %62 = vector.extract_strided_slice %11 {offsets = [6, 0], sizes = [1, 256], strides = [1, 1]} : vector<9x256xf32> to vector<1x256xf32>
    %63 = vector.broadcast %62 : vector<1x256xf32> to vector<4x256xf32>
    %64 = arith.mulf %61, %63 : vector<4x256xf32>
    %c6 = arith.constant 6 : index
    %c0_30 = arith.constant 0 : index
    %c0_31 = arith.constant 0 : index
    %65 = vector.load %arg4[%c6, %c0_30, %c0_31] : memref<9x4x4xf32, #tpu.memory_space<vmem>>, vector<1x4x4xf32>
    %66 = vector.shape_cast %65 : vector<1x4x4xf32> to vector<4x4xf32>
    %cst_32 = arith.constant dense<0.000000e+00> : vector<4x256xf32>
    %67 = tpu.matmul %66, %64, %cst_32 {dimension_numbers = #tpu.dot_dimension_numbers<[1], [0], [0], [1], [0, 0, 1, 1], [], []>} : vector<4x4xf32>, vector<4x256xf32>, vector<4x256xf32> -> vector<4x256xf32>
    %68 = arith.addf %60, %67 : vector<4x256xf32>
    %69 = vector.extract_strided_slice %10 {offsets = [0, 33], sizes = [4, 256], strides = [1, 1]} : vector<4x290xf32> to vector<4x256xf32>
    %70 = vector.extract_strided_slice %11 {offsets = [7, 0], sizes = [1, 256], strides = [1, 1]} : vector<9x256xf32> to vector<1x256xf32>
    %71 = vector.broadcast %70 : vector<1x256xf32> to vector<4x256xf32>
    %72 = arith.mulf %69, %71 : vector<4x256xf32>
    %c7 = arith.constant 7 : index
    %c0_33 = arith.constant 0 : index
    %c0_34 = arith.constant 0 : index
    %73 = vector.load %arg4[%c7, %c0_33, %c0_34] : memref<9x4x4xf32, #tpu.memory_space<vmem>>, vector<1x4x4xf32>
    %74 = vector.shape_cast %73 : vector<1x4x4xf32> to vector<4x4xf32>
    %cst_35 = arith.constant dense<0.000000e+00> : vector<4x256xf32>
    %75 = tpu.matmul %74, %72, %cst_35 {dimension_numbers = #tpu.dot_dimension_numbers<[1], [0], [0], [1], [0, 0, 1, 1], [], []>} : vector<4x4xf32>, vector<4x256xf32>, vector<4x256xf32> -> vector<4x256xf32>
    %76 = arith.addf %68, %75 : vector<4x256xf32>
    %77 = vector.extract_strided_slice %10 {offsets = [0, 34], sizes = [4, 256], strides = [1, 1]} : vector<4x290xf32> to vector<4x256xf32>
    %78 = vector.extract_strided_slice %11 {offsets = [8, 0], sizes = [1, 256], strides = [1, 1]} : vector<9x256xf32> to vector<1x256xf32>
    %79 = vector.broadcast %78 : vector<1x256xf32> to vector<4x256xf32>
    %80 = arith.mulf %77, %79 : vector<4x256xf32>
    %c8 = arith.constant 8 : index
    %c0_36 = arith.constant 0 : index
    %c0_37 = arith.constant 0 : index
    %81 = vector.load %arg4[%c8, %c0_36, %c0_37] : memref<9x4x4xf32, #tpu.memory_space<vmem>>, vector<1x4x4xf32>
    %82 = vector.shape_cast %81 : vector<1x4x4xf32> to vector<4x4xf32>
    %cst_38 = arith.constant dense<0.000000e+00> : vector<4x256xf32>
    %83 = tpu.matmul %82, %80, %cst_38 {dimension_numbers = #tpu.dot_dimension_numbers<[1], [0], [0], [1], [0, 0, 1, 1], [], []>} : vector<4x4xf32>, vector<4x256xf32>, vector<4x256xf32> -> vector<4x256xf32>
    %84 = arith.addf %76, %83 : vector<4x256xf32>
    %c0_39 = arith.constant 0 : index
    %c0_40 = arith.constant 0 : index
    %85 = vector.load %arg5[%c0_39, %c0_40] : memref<4x1xf32, #tpu.memory_space<vmem>>, vector<4x1xf32>
    %86 = vector.broadcast %85 : vector<4x1xf32> to vector<4x256xf32>
    %87 = arith.addf %84, %86 : vector<4x256xf32>
    %cst_41 = arith.constant 0.000000e+00 : f32
    %88 = vector.broadcast %cst_41 : f32 to vector<4x256xf32>
    %89 = arith.maximumf %87, %88 : vector<4x256xf32>
    %c0_42 = arith.constant 0 : index
    %c0_43 = arith.constant 0 : index
    %90 = vector.load %arg6[%c0_42, %c0_43] : memref<16x4xf32, #tpu.memory_space<vmem>>, vector<16x4xf32>
    %cst_44 = arith.constant dense<0.000000e+00> : vector<16x256xf32>
    %91 = tpu.matmul %90, %89, %cst_44 {dimension_numbers = #tpu.dot_dimension_numbers<[1], [0], [0], [1], [0, 0, 1, 1], [], []>} : vector<16x4xf32>, vector<4x256xf32>, vector<16x256xf32> -> vector<16x256xf32>
    %c0_45 = arith.constant 0 : index
    %c0_46 = arith.constant 0 : index
    %92 = vector.load %arg7[%c0_45, %c0_46] : memref<16x1xf32, #tpu.memory_space<vmem>>, vector<16x1xf32>
    %93 = vector.broadcast %92 : vector<16x1xf32> to vector<16x256xf32>
    %94 = arith.addf %91, %93 : vector<16x256xf32>
    %95 = arith.addf %94, %1 : vector<16x256xf32>
    %cst_47 = arith.constant 0.000000e+00 : f32
    %96 = vector.broadcast %cst_47 : f32 to vector<16x256xf32>
    %97 = arith.maximumf %95, %96 : vector<16x256xf32>
    %c0_48 = arith.constant 0 : index
    %c0_49 = arith.constant 0 : index
    %c0_50 = arith.constant 0 : index
    %98 = vector.load %arg9[%c0_48, %c0_49, %c0_50] : memref<1x16x256xf32, #tpu.memory_space<vmem>>, vector<1x16x256xf32>
    %99 = vector.shape_cast %98 : vector<1x16x256xf32> to vector<16x256xf32>
    %100 = vector.shape_cast %97 : vector<16x256xf32> to vector<1x16x256xf32>
    tpu.vector_store %arg9[%c0_48, %c0_49, %c0_50], %100 {strides = array<i32>} : memref<1x16x256xf32, #tpu.memory_space<vmem>>, vector<1x16x256xf32>,
    return
  }
  func.func @transform_0(%arg0: i32) -> (i32, i32, i32) {
    %c0_i32 = arith.constant 0 : i32
    %c0_i32_0 = arith.constant 0 : i32
    %c0_i32_1 = arith.constant 0 : i32
    return %arg0, %c0_i32, %c0_i32_0 : i32, i32, i32
  }
  func.func @transform_1(%arg0: i32) -> (i32, i32) {
    %c0_i32 = arith.constant 0 : i32
    %c0_i32_0 = arith.constant 0 : i32
    %c0_i32_1 = arith.constant 0 : i32
    return %c0_i32, %c0_i32_0 : i32, i32
  }
  func.func @transform_2(%arg0: i32) -> (i32, i32) {
    %c0_i32 = arith.constant 0 : i32
    %c0_i32_0 = arith.constant 0 : i32
    %c0_i32_1 = arith.constant 0 : i32
    return %c0_i32, %c0_i32_0 : i32, i32
  }
  func.func @transform_3(%arg0: i32) -> (i32, i32, i32) {
    %c0_i32 = arith.constant 0 : i32
    %c0_i32_0 = arith.constant 0 : i32
    %c0_i32_1 = arith.constant 0 : i32
    %c0_i32_2 = arith.constant 0 : i32
    return %c0_i32, %c0_i32_0, %c0_i32_1 : i32, i32, i32
  }
  func.func @transform_4(%arg0: i32) -> (i32, i32) {
    %c0_i32 = arith.constant 0 : i32
    %c0_i32_0 = arith.constant 0 : i32
    %c0_i32_1 = arith.constant 0 : i32
    return %c0_i32, %c0_i32_0 : i32, i32
  }
  func.func @transform_5(%arg0: i32) -> (i32, i32) {
    %c0_i32 = arith.constant 0 : i32
    %c0_i32_0 = arith.constant 0 : i32
    %c0_i32_1 = arith.constant 0 : i32
    return %c0_i32, %c0_i32_0 : i32, i32
  }
  func.func @transform_6(%arg0: i32) -> (i32, i32) {
    %c0_i32 = arith.constant 0 : i32
    %c0_i32_0 = arith.constant 0 : i32
    %c0_i32_1 = arith.constant 0 : i32
    return %c0_i32, %c0_i32_0 : i32, i32
  }
  func.func @transform_7(%arg0: i32) -> (i32, i32) {
    %c0_i32 = arith.constant 0 : i32
    %c0_i32_0 = arith.constant 0 : i32
    %c0_i32_1 = arith.constant 0 : i32
    return %c0_i32, %c0_i32_0 : i32, i32
  }
  func.func @transform_8(%arg0: i32) -> (i32, i32, i32) {
    %c0_i32 = arith.constant 0 : i32
    %c0_i32_0 = arith.constant 0 : i32
    %c0_i32_1 = arith.constant 0 : i32
    return %arg0, %c0_i32, %c0_i32_0 : i32, i32, i32
  }
}

</mosaic_0001>

<llo_original>
// kernel: med_conv_block_forward.1
$region0: #{med_conv_block_forward.1}
  #allocation0 [shape = 'u32[]', space=smem, size = 0x4, offset = 0x4, fixed_abs, tag = 'smem constant byte address 0x4 - core index']
  #allocation1 [shape = 'u32[144,128]{1,0:T(1,128)}', space=vmem, size = 0x12000, scoped, tag = 'internal scratch']
  %s0 = inlined_call_operand.vmem [shape: f32[2,16,256], index: 0, kind: input, shape index: {}]
  %s1 = inlined_call_operand.vmem [shape: f32[4,16], index: 1, kind: input, shape index: {}]
  %s2 = inlined_call_operand.vmem [shape: f32[4,1], index: 2, kind: input, shape index: {}]
  %s3 = inlined_call_operand.vmem [shape: f32[9,4,4], index: 3, kind: input, shape index: {}]
  %s4 = inlined_call_operand.vmem [shape: f32[4,1], index: 4, kind: input, shape index: {}]
  %s5 = inlined_call_operand.vmem [shape: f32[16,4], index: 5, kind: input, shape index: {}]
  %s6 = inlined_call_operand.vmem [shape: f32[16,1], index: 6, kind: input, shape index: {}]
  %s7 = inlined_call_operand.vmem [shape: f32[9,256], index: 7, kind: input, shape index: {}]
  %s8 = inlined_call_operand.vmem [shape: f32[2,16,256], index: 8, kind: output, shape index: {}]
  %s9 = sld [smem:[#allocation0]]
  $region65: #{med_conv_block_forward.1} parent=0
    _
  %s11 = ssub.s32 1, %s9
  %s12 = scalar_select 0, %s11, %s9
  loop: start=0, step=1, limit=4
  $region2: #{med_conv_block_forward.1} parent=0 // loop_pre_header
    _
  $region3: #{med_conv_block_forward.1} parent=0 // loop_header
    %s14 = sphi 0, %s18
    %p15 = scmp.ge.s32.totalorder %s14, 4
    %s24 = sphi 0, %s26
    %s27 = sphi 0, %s24
    %s28 = sphi 0, %s27
    %s44 = sphi 0, %s28
    %s48 = sphi 0, %s48
    %s50 = sphi 0, %s48
    %s51 = sphi 0, %s50
    %s65 = sphi 0, %s51
    %s69 = sphi 0, %s69
    %s71 = sphi 0, %s69
    %s72 = sphi 0, %s71
    %s86 = sphi 0, %s72
    %s90 = sphi 0, %s90
    %s92 = sphi 0, %s90
    %s93 = sphi 0, %s92
    %s107 = sphi 0, %s93
    %s111 = sphi 0, %s111
    %s113 = sphi 0, %s111
    %s114 = sphi 0, %s113
    %s128 = sphi 0, %s114
    %s132 = sphi 0, %s132
    %s134 = sphi 0, %s132
    %s135 = sphi 0, %s134
    %s149 = sphi 0, %s135
    %s153 = sphi 0, %s153
    %s155 = sphi 0, %s153
    %s156 = sphi 0, %s155
    %s170 = sphi 0, %s156
    %s174 = sphi 0, %s174
    %s176 = sphi 0, %s174
    %s177 = sphi 0, %s176
    %s191 = sphi 0, %s177
    %s197 = sphi 0, %s199
    %s200 = sphi 0, %s197
    %s201 = sphi 0, %s200
    %s217 = sphi 0, %s201
  $region4: #{med_conv_block_forward.1} parent=0 // loop_header_branch
    %17 = sbr.rel (%p15) target = $region8
  $region5: #{med_conv_block_forward.1} parent=0 // loop_body
    %s19 = ssub.s32 %s14, 1
    %s20 = ssub.s32 %s14, 2
    %s21 = sadd.s32 %s14, 1
    %s22 = ssub.s32 %s14, %s21
    %p23 = scmp.eq.s32.totalorder %s22, 0
    %s25 = sadd.s32 %s24, 1
    %s26 = scalar_select %p23, %s24, %s25
    %p29 = pneg %p23
    %p30 = scmp.eq.s32.totalorder %s14, 1
    %p31 = por %p29, %p30
    %p32 = scmp.ne.s32.totalorder %s24, %s27
    %p33 = scmp.eq.s32.totalorder %s14, 0
    %p34 = por %p32, %p33
    %p35 = scmp.ne.s32.totalorder %s24, %s27
    %p36 = scmp.eq.s32.totalorder %s19, 1
    %p37 = por %p35, %p36
    %p38 = scmp.ne.s32.totalorder %s27, %s28
    %p39 = scmp.eq.s32.totalorder %s19, 0
    %p40 = por %p38, %p39
    %p41 = scmp.ne.s32.totalorder %s27, %s28
    %p42 = scmp.eq.s32.totalorder %s20, 1
    %p43 = por %p41, %p42
    %p45 = scmp.ne.s32.totalorder %s28, %s44
    %p46 = scmp.eq.s32.totalorder %s20, 0
    %p47 = por %p45, %p46
    %s49 = sadd.s32 %s48, 1
    %p52 = scmp.eq.s32.totalorder %s14, 1
    %p53 = scmp.ne.s32.totalorder %s48, %s50
    %p54 = scmp.eq.s32.totalorder %s14, 0
    %p55 = por %p53, %p54
    %p56 = scmp.ne.s32.totalorder %s48, %s50
    %p57 = scmp.eq.s32.totalorder %s19, 1
    %p58 = por %p56, %p57
    %p59 = scmp.ne.s32.totalorder %s50, %s51
    %p60 = scmp.eq.s32.totalorder %s19, 0
    %p61 = por %p59, %p60
    %p62 = scmp.ne.s32.totalorder %s50, %s51
    %p63 = scmp.eq.s32.totalorder %s20, 1
    %p64 = por %p62, %p63
    %p66 = scmp.ne.s32.totalorder %s51, %s65
    %p67 = scmp.eq.s32.totalorder %s20, 0
    %p68 = por %p66, %p67
    %s70 = sadd.s32 %s69, 1
    %p73 = scmp.eq.s32.totalorder %s14, 1
    %p74 = scmp.ne.s32.totalorder %s69, %s71
    %p75 = scmp.eq.s32.totalorder %s14, 0
    %p76 = por %p74, %p75
    %p77 = scmp.ne.s32.totalorder %s69, %s71
    %p78 = scmp.eq.s32.totalorder %s19, 1
    %p79 = por %p77, %p78
    %p80 = scmp.ne.s32.totalorder %s71, %s72
    %p81 = scmp.eq.s32.totalorder %s19, 0
    %p82 = por %p80, %p81
    %p83 = scmp.ne.s32.totalorder %s71, %s72
    %p84 = scmp.eq.s32.totalorder %s20, 1
    %p85 = por %p83, %p84
    %p87 = scmp.ne.s32.totalorder %s72, %s86
    %p88 = scmp.eq.s32.totalorder %s20, 0
    %p89 = por %p87, %p88
    %s91 = sadd.s32 %s90, 1
    %p94 = scmp.eq.s32.totalorder %s14, 1
    %p95 = scmp.ne.s32.totalorder %s90, %s92
    %p96 = scmp.eq.s32.totalorder %s14, 0
    %p97 = por %p95, %p96
    %p98 = scmp.ne.s32.totalorder %s90, %s92
    %p99 = scmp.eq.s32.totalorder %s19, 1
    %p100 = por %p98, %p99
    %p101 = scmp.ne.s32.totalorder %s92, %s93
    %p102 = scmp.eq.s32.totalorder %s19, 0
    %p103 = por %p101, %p102
    %p104 = scmp.ne.s32.totalorder %s92, %s93
    %p105 = scmp.eq.s32.totalorder %s20, 1
    %p106 = por %p104, %p105
    %p108 = scmp.ne.s32.totalorder %s93, %s107
    %p109 = scmp.eq.s32.totalorder %s20, 0
    %p110 = por %p108, %p109
    %s112 = sadd.s32 %s111, 1
    %p115 = scmp.eq.s32.totalorder %s14, 1
    %p116 = scmp.ne.s32.totalorder %s111, %s113
    %p117 = scmp.eq.s32.totalorder %s14, 0
    %p118 = por %p116, %p117
    %p119 = scmp.ne.s32.totalorder %s111, %s113
    %p120 = scmp.eq.s32.totalorder %s19, 1
    %p121 = por %p119, %p120
    %p122 = scmp.ne.s32.totalorder %s113, %s114
    %p123 = scmp.eq.s32.totalorder %s19, 0
    %p124 = por %p122, %p123
    %p125 = scmp.ne.s32.totalorder %s113, %s114
    %p126 = scmp.eq.s32.totalorder %s20, 1
    %p127 = por %p125, %p126
    %p129 = scmp.ne.s32.totalorder %s114, %s128
    %p130 = scmp.eq.s32.totalorder %s20, 0
    %p131 = por %p129, %p130
    %s133 = sadd.s32 %s132, 1
    %p136 = scmp.eq.s32.totalorder %s14, 1
    %p137 = scmp.ne.s32.totalorder %s132, %s134
    %p138 = scmp.eq.s32.totalorder %s14, 0
    %p139 = por %p137, %p138
    %p140 = scmp.ne.s32.totalorder %s132, %s134
    %p141 = scmp.eq.s32.totalorder %s19, 1
    %p142 = por %p140, %p141
    %p143 = scmp.ne.s32.totalorder %s134, %s135
    %p144 = scmp.eq.s32.totalorder %s19, 0
    %p145 = por %p143, %p144
    %p146 = scmp.ne.s32.totalorder %s134, %s135
    %p147 = scmp.eq.s32.totalorder %s20, 1
    %p148 = por %p146, %p147
    %p150 = scmp.ne.s32.totalorder %s135, %s149
    %p151 = scmp.eq.s32.totalorder %s20, 0
    %p152 = por %p150, %p151
    %s154 = sadd.s32 %s153, 1
    %p157 = scmp.eq.s32.totalorder %s14, 1
    %p158 = scmp.ne.s32.totalorder %s153, %s155
    %p159 = scmp.eq.s32.totalorder %s14, 0
    %p160 = por %p158, %p159
    %p161 = scmp.ne.s32.totalorder %s153, %s155
    %p162 = scmp.eq.s32.totalorder %s19, 1
    %p163 = por %p161, %p162
    %p164 = scmp.ne.s32.totalorder %s155, %s156
    %p165 = scmp.eq.s32.totalorder %s19, 0
    %p166 = por %p164, %p165
    %p167 = scmp.ne.s32.totalorder %s155, %s156
    %p168 = scmp.eq.s32.totalorder %s20, 1
    %p169 = por %p167, %p168
    %p171 = scmp.ne.s32.totalorder %s156, %s170
    %p172 = scmp.eq.s32.totalorder %s20, 0
    %p173 = por %p171, %p172
    %s175 = sadd.s32 %s174, 1
    %p178 = scmp.eq.s32.totalorder %s14, 1
    %p179 = scmp.ne.s32.totalorder %s174, %s176
    %p180 = scmp.eq.s32.totalorder %s14, 0
    %p181 = por %p179, %p180
    %p182 = scmp.ne.s32.totalorder %s174, %s176
    %p183 = scmp.eq.s32.totalorder %s19, 1
    %p184 = por %p182, %p183
    %p185 = scmp.ne.s32.totalorder %s176, %s177
    %p186 = scmp.eq.s32.totalorder %s19, 0
    %p187 = por %p185, %p186
    %p188 = scmp.ne.s32.totalorder %s176, %s177
    %p189 = scmp.eq.s32.totalorder %s20, 1
    %p190 = por %p188, %p189
    %p192 = scmp.ne.s32.totalorder %s177, %s191
    %p193 = scmp.eq.s32.totalorder %s20, 0
    %p194 = por %p192, %p193
    %s195 = ssub.s32 %s14, %s21
    %p196 = scmp.eq.s32.totalorder %s195, 0
    %s198 = sadd.s32 %s197, 1
    %s199 = scalar_select %p196, %s197, %s198
    %p202 = pneg %p196
    %p203 = scmp.eq.s32.totalorder %s14, 1
    %p204 = por %p202, %p203
    %p205 = scmp.ne.s32.totalorder %s197, %s200
    %p206 = scmp.eq.s32.totalorder %s14, 0
    %p207 = por %p205, %p206
    %p208 = scmp.ne.s32.totalorder %s197, %s200
    %p209 = scmp.eq.s32.totalorder %s19, 1
    %p210 = por %p208, %p209
    %p211 = scmp.ne.s32.totalorder %s200, %s201
    %p212 = scmp.eq.s32.totalorder %s19, 0
    %p213 = por %p211, %p212
    %p214 = scmp.ne.s32.totalorder %s200, %s201
    %p215 = scmp.eq.s32.totalorder %s20, 1
    %p216 = por %p214, %p215
    %p218 = scmp.ne.s32.totalorder %s201, %s217
    %p219 = scmp.eq.s32.totalorder %s20, 0
    %p220 = por %p218, %p219
    %p221 = scmp.le.s32.totalorder 1, %s14
    %p222 = scmp.lt.s32.totalorder %s14, 3
    %p223 = pnand %p221, %p222
    %p224 = pneg %p223
    // Predicated region
    $region9: #{med_conv_block_forward.1} parent=5 // pred_check
      _
    $region10: #{med_conv_block_forward.1} parent=5 // pred_check_branch
      %226 = sbr.rel (%p223) target = $region12
    $region11: #{med_conv_block_forward.1} parent=5 // pred_region
      %s227 = ssub.s32 %s14, 1
      // Predicated region
      $region13: #{med_conv_block_forward.1} parent=11 // pred_check
        %p228 = pneg %p61
      $region14: #{med_conv_block_forward.1} parent=11 // pred_check_branch
        %230 = sbr.rel (%p228) target = $region16
      $region15: #{med_conv_block_forward.1} parent=11 // pred_region
        _
      $region16: #{med_conv_block_forward.1} parent=11 // pred_fallthru
        _
      // Predicated region
      $region17: #{med_conv_block_forward.1} parent=11 // pred_check
        %p231 = pneg %p82
      $region18: #{med_conv_block_forward.1} parent=11 // pred_check_branch
        %233 = sbr.rel (%p231) target = $region20
      $region19: #{med_conv_block_forward.1} parent=11 // pred_region
        _
      $region20: #{med_conv_block_forward.1} parent=11 // pred_fallthru
        _
      // Predicated region
      $region21: #{med_conv_block_forward.1} parent=11 // pred_check
        %p234 = pneg %p103
      $region22: #{med_conv_block_forward.1} parent=11 // pred_check_branch
        %236 = sbr.rel (%p234) target = $region24
      $region23: #{med_conv_block_forward.1} parent=11 // pred_region
        _
      $region24: #{med_conv_block_forward.1} parent=11 // pred_fallthru
        _
      // Predicated region
      $region25: #{med_conv_block_forward.1} parent=11 // pred_check
        %p237 = pneg %p124
      $region26: #{med_conv_block_forward.1} parent=11 // pred_check_branch
        %239 = sbr.rel (%p237) target = $region28
      $region27: #{med_conv_block_forward.1} parent=11 // pred_region
        _
      $region28: #{med_conv_block_forward.1} parent=11 // pred_fallthru
        _
      // Predicated region
      $region29: #{med_conv_block_forward.1} parent=11 // pred_check
        %p240 = pneg %p145
      $region30: #{med_conv_block_forward.1} parent=11 // pred_check_branch
        %242 = sbr.rel (%p240) target = $region32
      $region31: #{med_conv_block_forward.1} parent=11 // pred_region
        _
      $region32: #{med_conv_block_forward.1} parent=11 // pred_fallthru
        _
      // Predicated region
      $region33: #{med_conv_block_forward.1} parent=11 // pred_check
        %p243 = pneg %p166
      $region34: #{med_conv_block_forward.1} parent=11 // pred_check_branch
        %245 = sbr.rel (%p243) target = $region36
      $region35: #{med_conv_block_forward.1} parent=11 // pred_region
        _
      $region36: #{med_conv_block_forward.1} parent=11 // pred_fallthru
        _
      // Predicated region
      $region37: #{med_conv_block_forward.1} parent=11 // pred_check
        %p246 = pneg %p187
      $region38: #{med_conv_block_forward.1} parent=11 // pred_check_branch
        %248 = sbr.rel (%p246) target = $region40
      $region39: #{med_conv_block_forward.1} parent=11 // pred_region
        _
      $region40: #{med_conv_block_forward.1} parent=11 // pred_fallthru
        _
    $region12: #{med_conv_block_forward.1} parent=5 // pred_fallthru
      _
    %p249 = scmp.lt.s32.totalorder %s14, 2
    // Predicated region
    $region41: #{med_conv_block_forward.1} parent=5 // pred_check
      %p250 = pneg %p249
    $region42: #{med_conv_block_forward.1} parent=5 // pred_check_branch
      %252 = sbr.rel (%p250) target = $region44
    $region43: #{med_conv_block_forward.1} parent=5 // pred_region
      // Predicated region
      $region45: #{med_conv_block_forward.1} parent=43 // pred_check
        %p253 = pneg %p34
      $region46: #{med_conv_block_forward.1} parent=43 // pred_check_branch
        %255 = sbr.rel (%p253) target = $region48
      $region47: #{med_conv_block_forward.1} parent=43 // pred_region
        %p256 = scmp.lt.s32.totalorder %s14, 1
        %s257 = scalar_select %p256, %s14, 1
        %s258 = smul.addr %s257, 4
        %s259 = smul.addr %s258, 8
        %s260 = scalar_lea.vmem %s0, %s259
      $region48: #{med_conv_block_forward.1} parent=43 // pred_fallthru
        _
    $region44: #{med_conv_block_forward.1} parent=5 // pred_fallthru
      _
    %p261 = scmp.le.s32.totalorder 1, %s14
    %p262 = scmp.lt.s32.totalorder %s14, 3
    %p263 = pnand %p261, %p262
    %p264 = pneg %p263
    // Predicated region
    $region49: #{med_conv_block_forward.1} parent=5 // pred_check
      _
    $region50: #{med_conv_block_forward.1} parent=5 // pred_check_branch
      %266 = sbr.rel (%p263) target = $region52
    $region51: #{med_conv_block_forward.1} parent=5 // pred_region
      %s267 = ssub.s32 %s14, 1
      %p268 = scmp.lt.s32.totalorder %s19, 1
      %s269 = scalar_select %p268, %s19, 1
      %s270 = smul.addr %s269, 4
      %s271 = smul.addr %s270, 8
      %s272 = scalar_lea.vmem %s0, %s271
      %p273 = pneg %p40
      %p274 = pneg %p37
      %p275 = pneg %p61
      %p276 = pneg %p58
      %p277 = pneg %p82
      %p278 = pneg %p79
      %p279 = pneg %p103
      %p280 = pneg %p100
      %p281 = pneg %p124
      %p282 = pneg %p121
      %p283 = pneg %p145
      %p284 = pneg %p142
      %p285 = pneg %p166
      %p286 = pneg %p163
      %p287 = pneg %p187
      %p288 = pneg %p184
      %p289 = pneg %p213
      %p290 = pneg %p210
      %p291 = scmp.lt.s32.totalorder %s19, 1
      %s292 = scalar_select %p291, %s19, 1
      %s293 = smul.addr %s292, 4
      %s294 = smul.addr %s293, 8
      %s295 = scalar_lea.vmem %s8, %s294
      %p296 = scmp.lt.s32.totalorder %s19, 1
      %s297 = scalar_select %p296, %s19, 1
      %s298 = smul.addr %s297, 4
      %s299 = smul.addr %s298, 8
      %s300 = scalar_lea.vmem %s0, %s299
      %p301 = scmp.lt.s32.totalorder %s19, 1
      %s302 = scalar_select %p301, %s19, 1
      %s303 = smul.addr %s302, 4
      %s304 = smul.addr %s303, 8
      %s305 = scalar_lea.vmem %s8, %s304
      %v306 = vld [vmem:[%s300] sm:$0xff]
      %v307 = vld [vmem:[%s300 + $0x8] sm:$0xff]
      %v308 = vld [vmem:[%s300 + $0x10] sm:$0xff]
      %v309 = vld [vmem:[%s300 + $0x18] sm:$0xff]
      %v310 = vld [vmem:[%s1] sm:$0xf]
      %v311 = vld [vmem:[%s2] sm:$0xf]
      %313 = vset.pattern.permute.xlu0 0
      %314 = vperm.xlu0 %313, %v311
      %v315 = vpop.permute.xlu0 %314
      %vm317 = vcmask 130048
      %v319 = vsel %vm317, %v310, 0
      %321 = vmatprep.subr.mxu0 0.0
      %322 = vmatpush1.msra.mxu0 0.0
      %323 = vmatprep.subr.mxu0 0.0
      %324 = vmatpush1.msra.mxu0 0.0
      %325 = vmatprep.subr.mxu0 0.0
      %326 = vmatpush1.msra.mxu0 0.0
      %327 = vmatprep.subr.mxu0 0.0
      %328 = vmatpush1.msra.mxu0 0.0
      %329 = vmatprep.subr.mxu0 0.0
      %330 = vmatpush1.msra.mxu0 0.0
      %331 = vmatprep.subr.mxu0 0.0
      %332 = vmatpush1.msra.mxu0 0.0
      %333 = vmatprep.subr.mxu0 0.0
      %334 = vmatpush1.msra.mxu0 0.0
      %335 = vmatprep.subr.mxu0 0.0
      %336 = vmatpush1.msra.mxu0 0.0
      %337 = vmatprep.subr.mxu0 0.0
      %338 = vmatpush1.msra.mxu0 0.0
      %339 = vmatprep.subr.mxu0 0.0
      %340 = vmatpush1.msra.mxu0 0.0
      %341 = vmatprep.subr.mxu0 0.0
      %342 = vmatpush1.msra.mxu0 0.0
      %343 = vmatprep.subr.mxu0 0.0
      %344 = vmatpush1.msra.mxu0 0.0
      %345 = vmatprep.subr.mxu0 0.0
      %346 = vmatpush1.msra.mxu0 0.0
      %347 = vmatprep.subr.mxu0 0.0
      %348 = vmatpush1.msra.mxu0 0.0
      %349 = vmatprep.subr.mxu0 %v309
      %350 = vmatpush1.msra.mxu0 %v308
      %351 = vmatprep.subr.mxu0 %v307
      %352 = vmatpush1.msra.mxu0 %v306
      %353 = vmatprep.subr.mxu0 0.0
      %354 = vmatpush2.msra.mxu0 0.0
      %355 = vmatprep.subr.mxu0 0.0
      %356 = vmatpush2.msra.mxu0 0.0
      %357 = vmatprep.subr.mxu0 0.0
      %358 = vmatpush2.msra.mxu0 0.0
      %359 = vmatprep.subr.mxu0 0.0
      %360 = vmatpush2.msra.mxu0 0.0
      %361 = vmatprep.subr.mxu0 0.0
      %362 = vmatpush2.msra.mxu0 0.0
      %363 = vmatprep.subr.mxu0 0.0
      %364 = vmatpush2.msra.mxu0 0.0
      %365 = vmatprep.subr.mxu0 0.0
      %366 = vmatpush2.msra.mxu0 0.0
      %367 = vmatprep.subr.mxu0 0.0
      %368 = vmatpush2.msra.mxu0 0.0
      %369 = vmatprep.subr.mxu0 0.0
      %370 = vmatpush2.msra.mxu0 0.0
      %371 = vmatprep.subr.mxu0 0.0
      %372 = vmatpush2.msra.mxu0 0.0
      %373 = vmatprep.subr.mxu0 0.0
      %374 = vmatpush2.msra.mxu0 0.0
      %375 = vmatprep.subr.mxu0 0.0
      %376 = vmatpush2.msra.mxu0 0.0
      %377 = vmatprep.subr.mxu0 0.0
      %378 = vmatpush2.msra.mxu0 0.0
      %379 = vmatprep.subr.mxu0 0.0
      %380 = vmatpush2.msra.mxu0 0.0
      %381 = vmatprep.subr.mxu0 0.0
      %382 = vmatpush2.msra.mxu0 0.0
      %383 = vmatprep.subr.mxu0 0.0
      %384 = vmatpush2.msra.mxu0 0.0
      %385 = vmatprep.mubr.f32.mxu0 0.0
      %386 = vmatmul.mubr.f32.gmra.mxu0 %v319
      %v387 = vpop.f32.mrf.mxu0
      %v388 = vadd.f32 %v315, %v387
      %v389 = vpop.f32.mrf.mxu0
      %v390 = vadd.f32 %v315, %v389
      %391 = vdwg.mxu0
      %v392 = vmax.f32 %v388, 0.0
      %v393 = vmax.f32 %v390, 0.0
      %396 = vrot.lane.b32.xlu0 %v392, 17
      %v397 = vpop.permute.xlu0 %396
      %398 = vrot.lane.b32.xlu0 %v393, 17
      %v399 = vpop.permute.xlu0 %398
      %vm400 = vcmask 138240
      %v401 = vsel %vm400, %v397, %v399
      %v405 = vsel %vm400, 0.0, %v397
      %v406 = vsel %vm400, %v399, 0.0
      %v407 = vld [vmem:[%s7] sm:$0xff]
      %v408 = vld [vmem:[%s7 + $0x8] sm:$0xff]
      %v409 = vld [vmem:[%s7 + $0x10] sm:$0x1]
      %v410 = vld [vmem:[%s7 + $0x18] sm:$0x1]
      %v411 = vlaneseq
      %v412 = vshrl.u32 %v411, 7
      %v413 = vsub.s32 0, %v412
      %v414 = vrot.slane %v407, %v413
      %v415 = vlaneseq
      %v416 = vshrl.u32 %v415, 7
      %v417 = vsub.s32 0, %v416
      %v418 = vrot.slane %v408, %v417
      %v419 = vmul.f32 %v405, %v414
      %v420 = vmul.f32 %v401, %v418
      %v421 = vld [vmem:[%s3] sm:$0xf]
      %v422 = vlaneseq
      %v423 = vshrl.u32 %v422, 7
      %v424 = vsub.s32 1, %v423
      %v425 = vrot.slane %v407, %v424
      %v426 = vlaneseq
      %v427 = vshrl.u32 %v426, 7
      %v428 = vsub.s32 1, %v427
      %v429 = vrot.slane %v408, %v428
      %432 = vrot.lane.b32.xlu0 %v425, 1
      %v433 = vpop.permute.xlu0 %432
      %434 = vrot.lane.b32.xlu0 %v429, 1
      %v435 = vpop.permute.xlu0 %434
      %vm436 = vcmask 7168
      %v437 = vsel %vm436, %v433, %v435
      %v441 = vmul.f32 %v405, %v433
      %v442 = vmul.f32 %v401, %v437
      %v443 = vmul.f32 %v406, %v435
      %s444 = scalar_lea.vmem %s3, 4
      %v445 = vld [vmem:[%s444] sm:$0xf]
      %449 = vrot.lane.b32.xlu0 %v441, 127
      %v450 = vpop.permute.xlu0 %449
      %451 = vrot.lane.b32.xlu0 %v442, 127
      %v452 = vpop.permute.xlu0 %451
      %453 = vrot.lane.b32.xlu0 %v443, 127
      %v454 = vpop.permute.xlu0 %453
      %vm455 = vcmask 1039360
      %v456 = vsel %vm455, %v450, %v452
      %v457 = vsel %vm455, %v452, %v454
      %vm458 = vcmask 31744
      %v460 = vsel %vm458, %v445, 0
      %vm462 = vcmask 1043456
      %v463 = vsel %vm462, %v456, 0
      %v465 = vsel %vm462, %v457, 0
      %467 = vmatprep.subr.mxu0 0.0
      %468 = vmatpush1.msra.mxu0 0.0
      %469 = vmatprep.subr.mxu0 0.0
      %470 = vmatpush1.msra.mxu0 0.0
      %471 = vmatprep.subr.mxu0 0.0
      %472 = vmatpush1.msra.mxu0 0.0
      %473 = vmatprep.subr.mxu0 0.0
      %474 = vmatpush1.msra.mxu0 0.0
      %475 = vmatprep.subr.mxu0 0.0
      %476 = vmatpush1.msra.mxu0 0.0
      %477 = vmatprep.subr.mxu0 0.0
      %478 = vmatpush1.msra.mxu0 0.0
      %479 = vmatprep.subr.mxu0 0.0
      %480 = vmatpush1.msra.mxu0 0.0
      %481 = vmatprep.subr.mxu0 0.0
      %482 = vmatpush1.msra.mxu0 0.0
      %483 = vmatprep.subr.mxu0 0.0
      %484 = vmatpush1.msra.mxu0 0.0
      %485 = vmatprep.subr.mxu0 0.0
      %486 = vmatpush1.msra.mxu0 0.0
      %487 = vmatprep.subr.mxu0 0.0
      %488 = vmatpush1.msra.mxu0 0.0
      %489 = vmatprep.subr.mxu0 0.0
      %490 = vmatpush1.msra.mxu0 0.0
      %491 = vmatprep.subr.mxu0 0.0
      %492 = vmatpush1.msra.mxu0 0.0
      %493 = vmatprep.subr.mxu0 0.0
      %494 = vmatpush1.msra.mxu0 0.0
      %495 = vmatprep.subr.mxu0 0.0
      %496 = vmatpush1.msra.mxu0 0.0
      %497 = vmatprep.subr.mxu0 %v465
      %498 = vmatpush1.msra.mxu0 %v463
      %499 = vmatprep.subr.mxu0 0.0
      %500 = vmatpush2.msra.mxu0 0.0
      %501 = vmatprep.subr.mxu0 0.0
      %502 = vmatpush2.msra.mxu0 0.0
      %503 = vmatprep.subr.mxu0 0.0
      %504 = vmatpush2.msra.mxu0 0.0
      %505 = vmatprep.subr.mxu0 0.0
      %506 = vmatpush2.msra.mxu0 0.0
      %507 = vmatprep.subr.mxu0 0.0
      %508 = vmatpush2.msra.mxu0 0.0
      %509 = vmatprep.subr.mxu0 0.0
      %510 = vmatpush2.msra.mxu0 0.0
      %511 = vmatprep.subr.mxu0 0.0
      %512 = vmatpush2.msra.mxu0 0.0
      %513 = vmatprep.subr.mxu0 0.0
      %514 = vmatpush2.msra.mxu0 0.0
      %515 = vmatprep.subr.mxu0 0.0
      %516 = vmatpush2.msra.mxu0 0.0
      %517 = vmatprep.subr.mxu0 0.0
      %518 = vmatpush2.msra.mxu0 0.0
      %519 = vmatprep.subr.mxu0 0.0
      %520 = vmatpush2.msra.mxu0 0.0
      %521 = vmatprep.subr.mxu0 0.0
      %522 = vmatpush2.msra.mxu0 0.0
      %523 = vmatprep.subr.mxu0 0.0
      %524 = vmatpush2.msra.mxu0 0.0
      %525 = vmatprep.subr.mxu0 0.0
      %526 = vmatpush2.msra.mxu0 0.0
      %527 = vmatprep.subr.mxu0 0.0
      %528 = vmatpush2.msra.mxu0 0.0
      %529 = vmatprep.subr.mxu0 0.0
      %530 = vmatpush2.msra.mxu0 0.0
      %531 = vmatprep.mubr.f32.mxu0 0.0
      %532 = vmatmul.mubr.f32.gmra.mxu0 %v460
      %v533 = vpop.f32.mrf.mxu0
      %v534 = vadd.f32 0.0, %v533
      %v535 = vpop.f32.mrf.mxu0
      %v536 = vadd.f32 0.0, %v535
      %537 = vdwg.mxu0
      %v539 = vsel %vm458, %v421, 0
      %v542 = vsel %vm462, %v419, 0
      %v545 = vsel %vm462, %v420, 0
      %547 = vmatprep.subr.mxu0 0.0
      %548 = vmatpush1.msra.mxu0 0.0
      %549 = vmatprep.subr.mxu0 0.0
      %550 = vmatpush1.msra.mxu0 0.0
      %551 = vmatprep.subr.mxu0 0.0
      %552 = vmatpush1.msra.mxu0 0.0
      %553 = vmatprep.subr.mxu0 0.0
      %554 = vmatpush1.msra.mxu0 0.0
      %555 = vmatprep.subr.mxu0 0.0
      %556 = vmatpush1.msra.mxu0 0.0
      %557 = vmatprep.subr.mxu0 0.0
      %558 = vmatpush1.msra.mxu0 0.0
      %559 = vmatprep.subr.mxu0 0.0
      %560 = vmatpush1.msra.mxu0 0.0
      %561 = vmatprep.subr.mxu0 0.0
      %562 = vmatpush1.msra.mxu0 0.0
      %563 = vmatprep.subr.mxu0 0.0
      %564 = vmatpush1.msra.mxu0 0.0
      %565 = vmatprep.subr.mxu0 0.0
      %566 = vmatpush1.msra.mxu0 0.0
      %567 = vmatprep.subr.mxu0 0.0
      %568 = vmatpush1.msra.mxu0 0.0
      %569 = vmatprep.subr.mxu0 0.0
      %570 = vmatpush1.msra.mxu0 0.0
      %571 = vmatprep.subr.mxu0 0.0
      %572 = vmatpush1.msra.mxu0 0.0
      %573 = vmatprep.subr.mxu0 0.0
      %574 = vmatpush1.msra.mxu0 0.0
      %575 = vmatprep.subr.mxu0 0.0
      %576 = vmatpush1.msra.mxu0 0.0
      %577 = vmatprep.subr.mxu0 %v545
      %578 = vmatpush1.msra.mxu0 %v542
      %579 = vmatprep.subr.mxu0 0.0
      %580 = vmatpush2.msra.mxu0 0.0
      %581 = vmatprep.subr.mxu0 0.0
      %582 = vmatpush2.msra.mxu0 0.0
      %583 = vmatprep.subr.mxu0 0.0
      %584 = vmatpush2.msra.mxu0 0.0
      %585 = vmatprep.subr.mxu0 0.0
      %586 = vmatpush2.msra.mxu0 0.0
      %587 = vmatprep.subr.mxu0 0.0
      %588 = vmatpush2.msra.mxu0 0.0
      %589 = vmatprep.subr.mxu0 0.0
      %590 = vmatpush2.msra.mxu0 0.0
      %591 = vmatprep.subr.mxu0 0.0
      %592 = vmatpush2.msra.mxu0 0.0
      %593 = vmatprep.subr.mxu0 0.0
      %594 = vmatpush2.msra.mxu0 0.0
      %595 = vmatprep.subr.mxu0 0.0
      %596 = vmatpush2.msra.mxu0 0.0
      %597 = vmatprep.subr.mxu0 0.0
      %598 = vmatpush2.msra.mxu0 0.0
      %599 = vmatprep.subr.mxu0 0.0
      %600 = vmatpush2.msra.mxu0 0.0
      %601 = vmatprep.subr.mxu0 0.0
      %602 = vmatpush2.msra.mxu0 0.0
      %603 = vmatprep.subr.mxu0 0.0
      %604 = vmatpush2.msra.mxu0 0.0
      %605 = vmatprep.subr.mxu0 0.0
      %606 = vmatpush2.msra.mxu0 0.0
      %607 = vmatprep.subr.mxu0 0.0
      %608 = vmatpush2.msra.mxu0 0.0
      %609 = vmatprep.subr.mxu0 0.0
      %610 = vmatpush2.msra.mxu0 0.0
      %611 = vmatprep.mubr.f32.mxu0 0.0
      %612 = vmatmul.mubr.f32.gmra.mxu0 %v539
      %v613 = vpop.f32.mrf.mxu0
      %v614 = vadd.f32 %v534, %v613
      %v615 = vpop.f32.mrf.mxu0
      %v616 = vadd.f32 %v536, %v615
      %617 = vdwg.mxu0
      %v618 = vlaneseq
      %v619 = vshrl.u32 %v618, 7
      %v620 = vsub.s32 2, %v619
      %v621 = vrot.slane %v407, %v620
      %v622 = vlaneseq
      %v623 = vshrl.u32 %v622, 7
      %v624 = vsub.s32 2, %v623
      %v625 = vrot.slane %v408, %v624
      %628 = vrot.lane.b32.xlu0 %v621, 2
      %v629 = vpop.permute.xlu0 %628
      %630 = vrot.lane.b32.xlu0 %v625, 2
      %v631 = vpop.permute.xlu0 %630
      %vm632 = vcmask 15360
      %v633 = vsel %vm632, %v629, %v631
      %v637 = vmul.f32 %v405, %v629
      %v638 = vmul.f32 %v401, %v633
      %v639 = vmul.f32 %v406, %v631
      %s640 = scalar_lea.vmem %s3, 8
      %v641 = vld [vmem:[%s640] sm:$0xf]
      %645 = vrot.lane.b32.xlu0 %v637, 126
      %v646 = vpop.permute.xlu0 %645
      %647 = vrot.lane.b32.xlu0 %v638, 126
      %v648 = vpop.permute.xlu0 %647
      %649 = vrot.lane.b32.xlu0 %v639, 126
      %v650 = vpop.permute.xlu0 %649
      %vm651 = vcmask 1031168
      %v652 = vsel %vm651, %v646, %v648
      %v653 = vsel %vm651, %v648, %v650
      %v655 = vsel %vm458, %v641, 0
      %v657 = vsel %vm462, %v652, 0
      %v659 = vsel %vm462, %v653, 0
      %661 = vmatprep.subr.mxu0 0.0
      %662 = vmatpush1.msra.mxu0 0.0
      %663 = vmatprep.subr.mxu0 0.0
      %664 = vmatpush1.msra.mxu0 0.0
      %665 = vmatprep.subr.mxu0 0.0
      %666 = vmatpush1.msra.mxu0 0.0
      %667 = vmatprep.subr.mxu0 0.0
      %668 = vmatpush1.msra.mxu0 0.0
      %669 = vmatprep.subr.mxu0 0.0
      %670 = vmatpush1.msra.mxu0 0.0
      %671 = vmatprep.subr.mxu0 0.0
      %672 = vmatpush1.msra.mxu0 0.0
      %673 = vmatprep.subr.mxu0 0.0
      %674 = vmatpush1.msra.mxu0 0.0
      %675 = vmatprep.subr.mxu0 0.0
      %676 = vmatpush1.msra.mxu0 0.0
      %677 = vmatprep.subr.mxu0 0.0
      %678 = vmatpush1.msra.mxu0 0.0
      %679 = vmatprep.subr.mxu0 0.0
      %680 = vmatpush1.msra.mxu0 0.0
      %681 = vmatprep.subr.mxu0 0.0
      %682 = vmatpush1.msra.mxu0 0.0
      %683 = vmatprep.subr.mxu0 0.0
      %684 = vmatpush1.msra.mxu0 0.0
      %685 = vmatprep.subr.mxu0 0.0
      %686 = vmatpush1.msra.mxu0 0.0
      %687 = vmatprep.subr.mxu0 0.0
      %688 = vmatpush1.msra.mxu0 0.0
      %689 = vmatprep.subr.mxu0 0.0
      %690 = vmatpush1.msra.mxu0 0.0
      %691 = vmatprep.subr.mxu0 %v659
      %692 = vmatpush1.msra.mxu0 %v657
      %693 = vmatprep.subr.mxu0 0.0
      %694 = vmatpush2.msra.mxu0 0.0
      %695 = vmatprep.subr.mxu0 0.0
      %696 = vmatpush2.msra.mxu0 0.0
      %697 = vmatprep.subr.mxu0 0.0
      %698 = vmatpush2.msra.mxu0 0.0
      %699 = vmatprep.subr.mxu0 0.0
      %700 = vmatpush2.msra.mxu0 0.0
      %701 = vmatprep.subr.mxu0 0.0
      %702 = vmatpush2.msra.mxu0 0.0
      %703 = vmatprep.subr.mxu0 0.0
      %704 = vmatpush2.msra.mxu0 0.0
      %705 = vmatprep.subr.mxu0 0.0
      %706 = vmatpush2.msra.mxu0 0.0
      %707 = vmatprep.subr.mxu0 0.0
      %708 = vmatpush2.msra.mxu0 0.0
      %709 = vmatprep.subr.mxu0 0.0
      %710 = vmatpush2.msra.mxu0 0.0
      %711 = vmatprep.subr.mxu0 0.0
      %712 = vmatpush2.msra.mxu0 0.0
      %713 = vmatprep.subr.mxu0 0.0
      %714 = vmatpush2.msra.mxu0 0.0
      %715 = vmatprep.subr.mxu0 0.0
      %716 = vmatpush2.msra.mxu0 0.0
      %717 = vmatprep.subr.mxu0 0.0
      %718 = vmatpush2.msra.mxu0 0.0
      %719 = vmatprep.subr.mxu0 0.0
      %720 = vmatpush2.msra.mxu0 0.0
      %721 = vmatprep.subr.mxu0 0.0
      %722 = vmatpush2.msra.mxu0 0.0
      %723 = vmatprep.subr.mxu0 0.0
      %724 = vmatpush2.msra.mxu0 0.0
      %725 = vmatprep.mubr.f32.mxu0 0.0
      %726 = vmatmul.mubr.f32.gmra.mxu0 %v655
      %v727 = vpop.f32.mrf.mxu0
      %v728 = vadd.f32 0.0, %v727
      %v729 = vpop.f32.mrf.mxu0
      %v730 = vadd.f32 0.0, %v729
      %731 = vdwg.mxu0
      %v732 = vadd.f32 %v614, %v728
      %v733 = vadd.f32 %v616, %v730
      %v734 = vlaneseq
      %v735 = vshrl.u32 %v734, 7
      %v736 = vsub.s32 3, %v735
      %v737 = vrot.slane %v407, %v736
      %v738 = vlaneseq
      %v739 = vshrl.u32 %v738, 7
      %v740 = vsub.s32 3, %v739
      %v741 = vrot.slane %v408, %v740
      %744 = vrot.lane.b32.xlu0 %v737, 16
      %v745 = vpop.permute.xlu0 %744
      %746 = vrot.lane.b32.xlu0 %v741, 16
      %v747 = vpop.permute.xlu0 %746
      %v748 = vsel %vm317, %v745, %v747
      %v752 = vmul.f32 %v405, %v745
      %v753 = vmul.f32 %v401, %v748
      %v754 = vmul.f32 %v406, %v747
      %s755 = scalar_lea.vmem %s3, 12
      %v756 = vld [vmem:[%s755] sm:$0xf]
      %760 = vrot.lane.b32.xlu0 %v752, 112
      %v761 = vpop.permute.xlu0 %760
      %762 = vrot.lane.b32.xlu0 %v753, 112
      %v763 = vpop.permute.xlu0 %762
      %764 = vrot.lane.b32.xlu0 %v754, 112
      %v765 = vpop.permute.xlu0 %764
      %vm766 = vcmask 916480
      %v767 = vsel %vm766, %v761, %v763
      %v768 = vsel %vm766, %v763, %v765
      %v770 = vsel %vm458, %v756, 0
      %v772 = vsel %vm462, %v767, 0
      %v774 = vsel %vm462, %v768, 0
      %776 = vmatprep.subr.mxu0 0.0
      %777 = vmatpush1.msra.mxu0 0.0
      %778 = vmatprep.subr.mxu0 0.0
      %779 = vmatpush1.msra.mxu0 0.0
      %780 = vmatprep.subr.mxu0 0.0
      %781 = vmatpush1.msra.mxu0 0.0
      %782 = vmatprep.subr.mxu0 0.0
      %783 = vmatpush1.msra.mxu0 0.0
      %784 = vmatprep.subr.mxu0 0.0
      %785 = vmatpush1.msra.mxu0 0.0
      %786 = vmatprep.subr.mxu0 0.0
      %787 = vmatpush1.msra.mxu0 0.0
      %788 = vmatprep.subr.mxu0 0.0
      %789 = vmatpush1.msra.mxu0 0.0
      %790 = vmatprep.subr.mxu0 0.0
      %791 = vmatpush1.msra.mxu0 0.0
      %792 = vmatprep.subr.mxu0 0.0
      %793 = vmatpush1.msra.mxu0 0.0
      %794 = vmatprep.subr.mxu0 0.0
      %795 = vmatpush1.msra.mxu0 0.0
      %796 = vmatprep.subr.mxu0 0.0
      %797 = vmatpush1.msra.mxu0 0.0
      %798 = vmatprep.subr.mxu0 0.0
      %799 = vmatpush1.msra.mxu0 0.0
      %800 = vmatprep.subr.mxu0 0.0
      %801 = vmatpush1.msra.mxu0 0.0
      %802 = vmatprep.subr.mxu0 0.0
      %803 = vmatpush1.msra.mxu0 0.0
      %804 = vmatprep.subr.mxu0 0.0
      %805 = vmatpush1.msra.mxu0 0.0
      %806 = vmatprep.subr.mxu0 %v774
      %807 = vmatpush1.msra.mxu0 %v772
      %808 = vmatprep.subr.mxu0 0.0
      %809 = vmatpush2.msra.mxu0 0.0
      %810 = vmatprep.subr.mxu0 0.0
      %811 = vmatpush2.msra.mxu0 0.0
      %812 = vmatprep.subr.mxu0 0.0
      %813 = vmatpush2.msra.mxu0 0.0
      %814 = vmatprep.subr.mxu0 0.0
      %815 = vmatpush2.msra.mxu0 0.0
      %816 = vmatprep.subr.mxu0 0.0
      %817 = vmatpush2.msra.mxu0 0.0
      %818 = vmatprep.subr.mxu0 0.0
      %819 = vmatpush2.msra.mxu0 0.0
      %820 = vmatprep.subr.mxu0 0.0
      %821 = vmatpush2.msra.mxu0 0.0
      %822 = vmatprep.subr.mxu0 0.0
      %823 = vmatpush2.msra.mxu0 0.0
      %824 = vmatprep.subr.mxu0 0.0
      %825 = vmatpush2.msra.mxu0 0.0
      %826 = vmatprep.subr.mxu0 0.0
      %827 = vmatpush2.msra.mxu0 0.0
      %828 = vmatprep.subr.mxu0 0.0
      %829 = vmatpush2.msra.mxu0 0.0
      %830 = vmatprep.subr.mxu0 0.0
      %831 = vmatpush2.msra.mxu0 0.0
      %832 = vmatprep.subr.mxu0 0.0
      %833 = vmatpush2.msra.mxu0 0.0
      %834 = vmatprep.subr.mxu0 0.0
      %835 = vmatpush2.msra.mxu0 0.0
      %836 = vmatprep.subr.mxu0 0.0
      %837 = vmatpush2.msra.mxu0 0.0
      %838 = vmatprep.subr.mxu0 0.0
      %839 = vmatpush2.msra.mxu0 0.0
      %840 = vmatprep.mubr.f32.mxu0 0.0
      %841 = vmatmul.mubr.f32.gmra.mxu0 %v770
      %v842 = vpop.f32.mrf.mxu0
      %v843 = vadd.f32 0.0, %v842
      %v844 = vpop.f32.mrf.mxu0
      %v845 = vadd.f32 0.0, %v844
      %846 = vdwg.mxu0
      %v847 = vadd.f32 %v732, %v843
      %v848 = vadd.f32 %v733, %v845
      %v849 = vlaneseq
      %v850 = vshrl.u32 %v849, 7
      %v851 = vsub.s32 4, %v850
      %v852 = vrot.slane %v407, %v851
      %v853 = vlaneseq
      %v854 = vshrl.u32 %v853, 7
      %v855 = vsub.s32 4, %v854
      %v856 = vrot.slane %v408, %v855
      %859 = vrot.lane.b32.xlu0 %v852, 17
      %v860 = vpop.permute.xlu0 %859
      %861 = vrot.lane.b32.xlu0 %v856, 17
      %v862 = vpop.permute.xlu0 %861
      %v863 = vsel %vm400, %v860, %v862
      %v867 = vmul.f32 %v405, %v860
      %v868 = vmul.f32 %v401, %v863
      %v869 = vmul.f32 %v406, %v862
      %s870 = scalar_lea.vmem %s3, 16
      %v871 = vld [vmem:[%s870] sm:$0xf]
      %875 = vrot.lane.b32.xlu0 %v867, 111
      %v876 = vpop.permute.xlu0 %875
      %877 = vrot.lane.b32.xlu0 %v868, 111
      %v878 = vpop.permute.xlu0 %877
      %879 = vrot.lane.b32.xlu0 %v869, 111
      %v880 = vpop.permute.xlu0 %879
      %vm881 = vcmask 908288
      %v882 = vsel %vm881, %v876, %v878
      %v883 = vsel %vm881, %v878, %v880
      %v885 = vsel %vm458, %v871, 0
      %v887 = vsel %vm462, %v882, 0
      %v889 = vsel %vm462, %v883, 0
      %891 = vmatprep.subr.mxu0 0.0
      %892 = vmatpush1.msra.mxu0 0.0
      %893 = vmatprep.subr.mxu0 0.0
      %894 = vmatpush1.msra.mxu0 0.0
      %895 = vmatprep.subr.mxu0 0.0
      %896 = vmatpush1.msra.mxu0 0.0
      %897 = vmatprep.subr.mxu0 0.0
      %898 = vmatpush1.msra.mxu0 0.0
      %899 = vmatprep.subr.mxu0 0.0
      %900 = vmatpush1.msra.mxu0 0.0
      %901 = vmatprep.subr.mxu0 0.0
      %902 = vmatpush1.msra.mxu0 0.0
      %903 = vmatprep.subr.mxu0 0.0
      %904 = vmatpush1.msra.mxu0 0.0
      %905 = vmatprep.subr.mxu0 0.0
      %906 = vmatpush1.msra.mxu0 0.0
      %907 = vmatprep.subr.mxu0 0.0
      %908 = vmatpush1.msra.mxu0 0.0
      %909 = vmatprep.subr.mxu0 0.0
      %910 = vmatpush1.msra.mxu0 0.0
      %911 = vmatprep.subr.mxu0 0.0
      %912 = vmatpush1.msra.mxu0 0.0
      %913 = vmatprep.subr.mxu0 0.0
      %914 = vmatpush1.msra.mxu0 0.0
      %915 = vmatprep.subr.mxu0 0.0
      %916 = vmatpush1.msra.mxu0 0.0
      %917 = vmatprep.subr.mxu0 0.0
      %918 = vmatpush1.msra.mxu0 0.0
      %919 = vmatprep.subr.mxu0 0.0
      %920 = vmatpush1.msra.mxu0 0.0
      %921 = vmatprep.subr.mxu0 %v889
      %922 = vmatpush1.msra.mxu0 %v887
      %923 = vmatprep.subr.mxu0 0.0
      %924 = vmatpush2.msra.mxu0 0.0
      %925 = vmatprep.subr.mxu0 0.0
      %926 = vmatpush2.msra.mxu0 0.0
      %927 = vmatprep.subr.mxu0 0.0
      %928 = vmatpush2.msra.mxu0 0.0
      %929 = vmatprep.subr.mxu0 0.0
      %930 = vmatpush2.msra.mxu0 0.0
      %931 = vmatprep.subr.mxu0 0.0
      %932 = vmatpush2.msra.mxu0 0.0
      %933 = vmatprep.subr.mxu0 0.0
      %934 = vmatpush2.msra.mxu0 0.0
      %935 = vmatprep.subr.mxu0 0.0
      %936 = vmatpush2.msra.mxu0 0.0
      %937 = vmatprep.subr.mxu0 0.0
      %938 = vmatpush2.msra.mxu0 0.0
      %939 = vmatprep.subr.mxu0 0.0
      %940 = vmatpush2.msra.mxu0 0.0
      %941 = vmatprep.subr.mxu0 0.0
      %942 = vmatpush2.msra.mxu0 0.0
      %943 = vmatprep.subr.mxu0 0.0
      %944 = vmatpush2.msra.mxu0 0.0
      %945 = vmatprep.subr.mxu0 0.0
      %946 = vmatpush2.msra.mxu0 0.0
      %947 = vmatprep.subr.mxu0 0.0
      %948 = vmatpush2.msra.mxu0 0.0
      %949 = vmatprep.subr.mxu0 0.0
      %950 = vmatpush2.msra.mxu0 0.0
      %951 = vmatprep.subr.mxu0 0.0
      %952 = vmatpush2.msra.mxu0 0.0
      %953 = vmatprep.subr.mxu0 0.0
      %954 = vmatpush2.msra.mxu0 0.0
      %955 = vmatprep.mubr.f32.mxu0 0.0
      %956 = vmatmul.mubr.f32.gmra.mxu0 %v885
      %v957 = vpop.f32.mrf.mxu0
      %v958 = vadd.f32 0.0, %v957
      %v959 = vpop.f32.mrf.mxu0
      %v960 = vadd.f32 0.0, %v959
      %961 = vdwg.mxu0
      %v962 = vadd.f32 %v847, %v958
      %v963 = vadd.f32 %v848, %v960
      %v964 = vlaneseq
      %v965 = vshrl.u32 %v964, 7
      %v966 = vsub.s32 5, %v965
      %v967 = vrot.slane %v407, %v966
      %v968 = vlaneseq
      %v969 = vshrl.u32 %v968, 7
      %v970 = vsub.s32 5, %v969
      %v971 = vrot.slane %v408, %v970
      %974 = vrot.lane.b32.xlu0 %v967, 18
      %v975 = vpop.permute.xlu0 %974
      %976 = vrot.lane.b32.xlu0 %v971, 18
      %v977 = vpop.permute.xlu0 %976
      %vm978 = vcmask 146432
      %v979 = vsel %vm978, %v975, %v977
      %v983 = vmul.f32 %v405, %v975
      %v984 = vmul.f32 %v401, %v979
      %v985 = vmul.f32 %v406, %v977
      %s986 = scalar_lea.vmem %s3, 20
      %v987 = vld [vmem:[%s986] sm:$0xf]
      %991 = vrot.lane.b32.xlu0 %v983, 110
      %v992 = vpop.permute.xlu0 %991
      %993 = vrot.lane.b32.xlu0 %v984, 110
      %v994 = vpop.permute.xlu0 %993
      %995 = vrot.lane.b32.xlu0 %v985, 110
      %v996 = vpop.permute.xlu0 %995
      %vm997 = vcmask 900096
      %v998 = vsel %vm997, %v992, %v994
      %v999 = vsel %vm997, %v994, %v996
      %v1001 = vsel %vm458, %v987, 0
      %v1003 = vsel %vm462, %v998, 0
      %v1005 = vsel %vm462, %v999, 0
      %1007 = vmatprep.subr.mxu0 0.0
      %1008 = vmatpush1.msra.mxu0 0.0
      %1009 = vmatprep.subr.mxu0 0.0
      %1010 = vmatpush1.msra.mxu0 0.0
      %1011 = vmatprep.subr.mxu0 0.0
      %1012 = vmatpush1.msra.mxu0 0.0
      %1013 = vmatprep.subr.mxu0 0.0
      %1014 = vmatpush1.msra.mxu0 0.0
      %1015 = vmatprep.subr.mxu0 0.0
      %1016 = vmatpush1.msra.mxu0 0.0
      %1017 = vmatprep.subr.mxu0 0.0
      %1018 = vmatpush1.msra.mxu0 0.0
      %1019 = vmatprep.subr.mxu0 0.0
      %1020 = vmatpush1.msra.mxu0 0.0
      %1021 = vmatprep.subr.mxu0 0.0
      %1022 = vmatpush1.msra.mxu0 0.0
      %1023 = vmatprep.subr.mxu0 0.0
      %1024 = vmatpush1.msra.mxu0 0.0
      %1025 = vmatprep.subr.mxu0 0.0
      %1026 = vmatpush1.msra.mxu0 0.0
      %1027 = vmatprep.subr.mxu0 0.0
      %1028 = vmatpush1.msra.mxu0 0.0
      %1029 = vmatprep.subr.mxu0 0.0
      %1030 = vmatpush1.msra.mxu0 0.0
      %1031 = vmatprep.subr.mxu0 0.0
      %1032 = vmatpush1.msra.mxu0 0.0
      %1033 = vmatprep.subr.mxu0 0.0
      %1034 = vmatpush1.msra.mxu0 0.0
      %1035 = vmatprep.subr.mxu0 0.0
      %1036 = vmatpush1.msra.mxu0 0.0
      %1037 = vmatprep.subr.mxu0 %v1005
      %1038 = vmatpush1.msra.mxu0 %v1003
      %1039 = vmatprep.subr.mxu0 0.0
      %1040 = vmatpush2.msra.mxu0 0.0
      %1041 = vmatprep.subr.mxu0 0.0
      %1042 = vmatpush2.msra.mxu0 0.0
      %1043 = vmatprep.subr.mxu0 0.0
      %1044 = vmatpush2.msra.mxu0 0.0
      %1045 = vmatprep.subr.mxu0 0.0
      %1046 = vmatpush2.msra.mxu0 0.0
      %1047 = vmatprep.subr.mxu0 0.0
      %1048 = vmatpush2.msra.mxu0 0.0
      %1049 = vmatprep.subr.mxu0 0.0
      %1050 = vmatpush2.msra.mxu0 0.0
      %1051 = vmatprep.subr.mxu0 0.0
      %1052 = vmatpush2.msra.mxu0 0.0
      %1053 = vmatprep.subr.mxu0 0.0
      %1054 = vmatpush2.msra.mxu0 0.0
      %1055 = vmatprep.subr.mxu0 0.0
      %1056 = vmatpush2.msra.mxu0 0.0
      %1057 = vmatprep.subr.mxu0 0.0
      %1058 = vmatpush2.msra.mxu0 0.0
      %1059 = vmatprep.subr.mxu0 0.0
      %1060 = vmatpush2.msra.mxu0 0.0
      %1061 = vmatprep.subr.mxu0 0.0
      %1062 = vmatpush2.msra.mxu0 0.0
      %1063 = vmatprep.subr.mxu0 0.0
      %1064 = vmatpush2.msra.mxu0 0.0
      %1065 = vmatprep.subr.mxu0 0.0
      %1066 = vmatpush2.msra.mxu0 0.0
      %1067 = vmatprep.subr.mxu0 0.0
      %1068 = vmatpush2.msra.mxu0 0.0
      %1069 = vmatprep.subr.mxu0 0.0
      %1070 = vmatpush2.msra.mxu0 0.0
      %1071 = vmatprep.mubr.f32.mxu0 0.0
      %1072 = vmatmul.mubr.f32.gmra.mxu0 %v1001
      %v1073 = vpop.f32.mrf.mxu0
      %v1074 = vadd.f32 0.0, %v1073
      %v1075 = vpop.f32.mrf.mxu0
      %v1076 = vadd.f32 0.0, %v1075
      %1077 = vdwg.mxu0
      %v1078 = vadd.f32 %v962, %v1074
      %v1079 = vadd.f32 %v963, %v1076
      %v1080 = vlaneseq
      %v1081 = vshrl.u32 %v1080, 7
      %v1082 = vsub.s32 6, %v1081
      %v1083 = vrot.slane %v407, %v1082
      %v1084 = vlaneseq
      %v1085 = vshrl.u32 %v1084, 7
      %v1086 = vsub.s32 6, %v1085
      %v1087 = vrot.slane %v408, %v1086
      %1090 = vrot.lane.b32.xlu0 %v1083, 32
      %v1091 = vpop.permute.xlu0 %1090
      %1092 = vrot.lane.b32.xlu0 %v1087, 32
      %v1093 = vpop.permute.xlu0 %1092
      %vm1094 = vcmask 261120
      %v1095 = vsel %vm1094, %v1091, %v1093
      %v1099 = vmul.f32 %v405, %v1091
      %v1100 = vmul.f32 %v401, %v1095
      %v1101 = vmul.f32 %v406, %v1093
      %s1102 = scalar_lea.vmem %s3, 24
      %v1103 = vld [vmem:[%s1102] sm:$0xf]
      %1107 = vrot.lane.b32.xlu0 %v1099, 96
      %v1108 = vpop.permute.xlu0 %1107
      %1109 = vrot.lane.b32.xlu0 %v1100, 96
      %v1110 = vpop.permute.xlu0 %1109
      %1111 = vrot.lane.b32.xlu0 %v1101, 96
      %v1112 = vpop.permute.xlu0 %1111
      %vm1113 = vcmask 785408
      %v1114 = vsel %vm1113, %v1108, %v1110
      %v1115 = vsel %vm1113, %v1110, %v1112
      %v1117 = vsel %vm458, %v1103, 0
      %v1119 = vsel %vm462, %v1114, 0
      %v1121 = vsel %vm462, %v1115, 0
      %1123 = vmatprep.subr.mxu0 0.0
      %1124 = vmatpush1.msra.mxu0 0.0
      %1125 = vmatprep.subr.mxu0 0.0
      %1126 = vmatpush1.msra.mxu0 0.0
      %1127 = vmatprep.subr.mxu0 0.0
      %1128 = vmatpush1.msra.mxu0 0.0
      %1129 = vmatprep.subr.mxu0 0.0
      %1130 = vmatpush1.msra.mxu0 0.0
      %1131 = vmatprep.subr.mxu0 0.0
      %1132 = vmatpush1.msra.mxu0 0.0
      %1133 = vmatprep.subr.mxu0 0.0
      %1134 = vmatpush1.msra.mxu0 0.0
      %1135 = vmatprep.subr.mxu0 0.0
      %1136 = vmatpush1.msra.mxu0 0.0
      %1137 = vmatprep.subr.mxu0 0.0
      %1138 = vmatpush1.msra.mxu0 0.0
      %1139 = vmatprep.subr.mxu0 0.0
      %1140 = vmatpush1.msra.mxu0 0.0
      %1141 = vmatprep.subr.mxu0 0.0
      %1142 = vmatpush1.msra.mxu0 0.0
      %1143 = vmatprep.subr.mxu0 0.0
      %1144 = vmatpush1.msra.mxu0 0.0
      %1145 = vmatprep.subr.mxu0 0.0
      %1146 = vmatpush1.msra.mxu0 0.0
      %1147 = vmatprep.subr.mxu0 0.0
      %1148 = vmatpush1.msra.mxu0 0.0
      %1149 = vmatprep.subr.mxu0 0.0
      %1150 = vmatpush1.msra.mxu0 0.0
      %1151 = vmatprep.subr.mxu0 0.0
      %1152 = vmatpush1.msra.mxu0 0.0
      %1153 = vmatprep.subr.mxu0 %v1121
      %1154 = vmatpush1.msra.mxu0 %v1119
      %1155 = vmatprep.subr.mxu0 0.0
      %1156 = vmatpush2.msra.mxu0 0.0
      %1157 = vmatprep.subr.mxu0 0.0
      %1158 = vmatpush2.msra.mxu0 0.0
      %1159 = vmatprep.subr.mxu0 0.0
      %1160 = vmatpush2.msra.mxu0 0.0
      %1161 = vmatprep.subr.mxu0 0.0
      %1162 = vmatpush2.msra.mxu0 0.0
      %1163 = vmatprep.subr.mxu0 0.0
      %1164 = vmatpush2.msra.mxu0 0.0
      %1165 = vmatprep.subr.mxu0 0.0
      %1166 = vmatpush2.msra.mxu0 0.0
      %1167 = vmatprep.subr.mxu0 0.0
      %1168 = vmatpush2.msra.mxu0 0.0
      %1169 = vmatprep.subr.mxu0 0.0
      %1170 = vmatpush2.msra.mxu0 0.0
      %1171 = vmatprep.subr.mxu0 0.0
      %1172 = vmatpush2.msra.mxu0 0.0
      %1173 = vmatprep.subr.mxu0 0.0
      %1174 = vmatpush2.msra.mxu0 0.0
      %1175 = vmatprep.subr.mxu0 0.0
      %1176 = vmatpush2.msra.mxu0 0.0
      %1177 = vmatprep.subr.mxu0 0.0
      %1178 = vmatpush2.msra.mxu0 0.0
      %1179 = vmatprep.subr.mxu0 0.0
      %1180 = vmatpush2.msra.mxu0 0.0
      %1181 = vmatprep.subr.mxu0 0.0
      %1182 = vmatpush2.msra.mxu0 0.0
      %1183 = vmatprep.subr.mxu0 0.0
      %1184 = vmatpush2.msra.mxu0 0.0
      %1185 = vmatprep.subr.mxu0 0.0
      %1186 = vmatpush2.msra.mxu0 0.0
      %1187 = vmatprep.mubr.f32.mxu0 0.0
      %1188 = vmatmul.mubr.f32.gmra.mxu0 %v1117
      %v1189 = vpop.f32.mrf.mxu0
      %v1190 = vadd.f32 0.0, %v1189
      %v1191 = vpop.f32.mrf.mxu0
      %v1192 = vadd.f32 0.0, %v1191
      %1193 = vdwg.mxu0
      %v1194 = vadd.f32 %v1078, %v1190
      %v1195 = vadd.f32 %v1079, %v1192
      %v1196 = vlaneseq
      %v1197 = vshrl.u32 %v1196, 7
      %v1198 = vsub.s32 7, %v1197
      %v1199 = vrot.slane %v407, %v1198
      %v1200 = vlaneseq
      %v1201 = vshrl.u32 %v1200, 7
      %v1202 = vsub.s32 7, %v1201
      %v1203 = vrot.slane %v408, %v1202
      %1206 = vrot.lane.b32.xlu0 %v1199, 33
      %v1207 = vpop.permute.xlu0 %1206
      %1208 = vrot.lane.b32.xlu0 %v1203, 33
      %v1209 = vpop.permute.xlu0 %1208
      %vm1210 = vcmask 269312
      %v1211 = vsel %vm1210, %v1207, %v1209
      %v1215 = vmul.f32 %v405, %v1207
      %v1216 = vmul.f32 %v401, %v1211
      %v1217 = vmul.f32 %v406, %v1209
      %s1218 = scalar_lea.vmem %s3, 28
      %v1219 = vld [vmem:[%s1218] sm:$0xf]
      %1223 = vrot.lane.b32.xlu0 %v1215, 95
      %v1224 = vpop.permute.xlu0 %1223
      %1225 = vrot.lane.b32.xlu0 %v1216, 95
      %v1226 = vpop.permute.xlu0 %1225
      %1227 = vrot.lane.b32.xlu0 %v1217, 95
      %v1228 = vpop.permute.xlu0 %1227
      %vm1229 = vcmask 777216
      %v1230 = vsel %vm1229, %v1224, %v1226
      %v1231 = vsel %vm1229, %v1226, %v1228
      %v1233 = vsel %vm458, %v1219, 0
      %v1235 = vsel %vm462, %v1230, 0
      %v1237 = vsel %vm462, %v1231, 0
      %1239 = vmatprep.subr.mxu0 0.0
      %1240 = vmatpush1.msra.mxu0 0.0
      %1241 = vmatprep.subr.mxu0 0.0
      %1242 = vmatpush1.msra.mxu0 0.0
      %1243 = vmatprep.subr.mxu0 0.0
      %1244 = vmatpush1.msra.mxu0 0.0
      %1245 = vmatprep.subr.mxu0 0.0
      %1246 = vmatpush1.msra.mxu0 0.0
      %1247 = vmatprep.subr.mxu0 0.0
      %1248 = vmatpush1.msra.mxu0 0.0
      %1249 = vmatprep.subr.mxu0 0.0
      %1250 = vmatpush1.msra.mxu0 0.0
      %1251 = vmatprep.subr.mxu0 0.0
      %1252 = vmatpush1.msra.mxu0 0.0
      %1253 = vmatprep.subr.mxu0 0.0
      %1254 = vmatpush1.msra.mxu0 0.0
      %1255 = vmatprep.subr.mxu0 0.0
      %1256 = vmatpush1.msra.mxu0 0.0
      %1257 = vmatprep.subr.mxu0 0.0
      %1258 = vmatpush1.msra.mxu0 0.0
      %1259 = vmatprep.subr.mxu0 0.0
      %1260 = vmatpush1.msra.mxu0 0.0
      %1261 = vmatprep.subr.mxu0 0.0
      %1262 = vmatpush1.msra.mxu0 0.0
      %1263 = vmatprep.subr.mxu0 0.0
      %1264 = vmatpush1.msra.mxu0 0.0
      %1265 = vmatprep.subr.mxu0 0.0
      %1266 = vmatpush1.msra.mxu0 0.0
      %1267 = vmatprep.subr.mxu0 0.0
      %1268 = vmatpush1.msra.mxu0 0.0
      %1269 = vmatprep.subr.mxu0 %v1237
      %1270 = vmatpush1.msra.mxu0 %v1235
      %1271 = vmatprep.subr.mxu0 0.0
      %1272 = vmatpush2.msra.mxu0 0.0
      %1273 = vmatprep.subr.mxu0 0.0
      %1274 = vmatpush2.msra.mxu0 0.0
      %1275 = vmatprep.subr.mxu0 0.0
      %1276 = vmatpush2.msra.mxu0 0.0
      %1277 = vmatprep.subr.mxu0 0.0
      %1278 = vmatpush2.msra.mxu0 0.0
      %1279 = vmatprep.subr.mxu0 0.0
      %1280 = vmatpush2.msra.mxu0 0.0
      %1281 = vmatprep.subr.mxu0 0.0
      %1282 = vmatpush2.msra.mxu0 0.0
      %1283 = vmatprep.subr.mxu0 0.0
      %1284 = vmatpush2.msra.mxu0 0.0
      %1285 = vmatprep.subr.mxu0 0.0
      %1286 = vmatpush2.msra.mxu0 0.0
      %1287 = vmatprep.subr.mxu0 0.0
      %1288 = vmatpush2.msra.mxu0 0.0
      %1289 = vmatprep.subr.mxu0 0.0
      %1290 = vmatpush2.msra.mxu0 0.0
      %1291 = vmatprep.subr.mxu0 0.0
      %1292 = vmatpush2.msra.mxu0 0.0
      %1293 = vmatprep.subr.mxu0 0.0
      %1294 = vmatpush2.msra.mxu0 0.0
      %1295 = vmatprep.subr.mxu0 0.0
      %1296 = vmatpush2.msra.mxu0 0.0
      %1297 = vmatprep.subr.mxu0 0.0
      %1298 = vmatpush2.msra.mxu0 0.0
      %1299 = vmatprep.subr.mxu0 0.0
      %1300 = vmatpush2.msra.mxu0 0.0
      %1301 = vmatprep.subr.mxu0 0.0
      %1302 = vmatpush2.msra.mxu0 0.0
      %1303 = vmatprep.mubr.f32.mxu0 0.0
      %1304 = vmatmul.mubr.f32.gmra.mxu0 %v1233
      %v1305 = vpop.f32.mrf.mxu0
      %v1306 = vadd.f32 0.0, %v1305
      %v1307 = vpop.f32.mrf.mxu0
      %v1308 = vadd.f32 0.0, %v1307
      %1309 = vdwg.mxu0
      %v1310 = vadd.f32 %v1194, %v1306
      %v1311 = vadd.f32 %v1195, %v1308
      %v1312 = vlaneseq
      %v1313 = vshrl.u32 %v1312, 7
      %v1314 = vsub.s32 0, %v1313
      %v1315 = vrot.slane %v409, %v1314
      %v1316 = vlaneseq
      %v1317 = vshrl.u32 %v1316, 7
      %v1318 = vsub.s32 0, %v1317
      %v1319 = vrot.slane %v410, %v1318
      %1322 = vrot.lane.b32.xlu0 %v1315, 34
      %v1323 = vpop.permute.xlu0 %1322
      %1324 = vrot.lane.b32.xlu0 %v1319, 34
      %v1325 = vpop.permute.xlu0 %1324
      %vm1326 = vcmask 277504
      %v1327 = vsel %vm1326, %v1323, %v1325
      %v1331 = vmul.f32 %v405, %v1323
      %v1332 = vmul.f32 %v401, %v1327
      %v1333 = vmul.f32 %v406, %v1325
      %s1334 = scalar_lea.vmem %s3, 32
      %v1335 = vld [vmem:[%s1334] sm:$0xf]
      %1339 = vrot.lane.b32.xlu0 %v1331, 94
      %v1340 = vpop.permute.xlu0 %1339
      %1341 = vrot.lane.b32.xlu0 %v1332, 94
      %v1342 = vpop.permute.xlu0 %1341
      %1343 = vrot.lane.b32.xlu0 %v1333, 94
      %v1344 = vpop.permute.xlu0 %1343
      %vm1345 = vcmask 769024
      %v1346 = vsel %vm1345, %v1340, %v1342
      %v1347 = vsel %vm1345, %v1342, %v1344
      %v1349 = vsel %vm458, %v1335, 0
      %v1351 = vsel %vm462, %v1346, 0
      %v1353 = vsel %vm462, %v1347, 0
      %1355 = vmatprep.subr.mxu0 0.0
      %1356 = vmatpush1.msra.mxu0 0.0
      %1357 = vmatprep.subr.mxu0 0.0
      %1358 = vmatpush1.msra.mxu0 0.0
      %1359 = vmatprep.subr.mxu0 0.0
      %1360 = vmatpush1.msra.mxu0 0.0
      %1361 = vmatprep.subr.mxu0 0.0
      %1362 = vmatpush1.msra.mxu0 0.0
      %1363 = vmatprep.subr.mxu0 0.0
      %1364 = vmatpush1.msra.mxu0 0.0
      %1365 = vmatprep.subr.mxu0 0.0
      %1366 = vmatpush1.msra.mxu0 0.0
      %1367 = vmatprep.subr.mxu0 0.0
      %1368 = vmatpush1.msra.mxu0 0.0
      %1369 = vmatprep.subr.mxu0 0.0
      %1370 = vmatpush1.msra.mxu0 0.0
      %1371 = vmatprep.subr.mxu0 0.0
      %1372 = vmatpush1.msra.mxu0 0.0
      %1373 = vmatprep.subr.mxu0 0.0
      %1374 = vmatpush1.msra.mxu0 0.0
      %1375 = vmatprep.subr.mxu0 0.0
      %1376 = vmatpush1.msra.mxu0 0.0
      %1377 = vmatprep.subr.mxu0 0.0
      %1378 = vmatpush1.msra.mxu0 0.0
      %1379 = vmatprep.subr.mxu0 0.0
      %1380 = vmatpush1.msra.mxu0 0.0
      %1381 = vmatprep.subr.mxu0 0.0
      %1382 = vmatpush1.msra.mxu0 0.0
      %1383 = vmatprep.subr.mxu0 0.0
      %1384 = vmatpush1.msra.mxu0 0.0
      %1385 = vmatprep.subr.mxu0 %v1353
      %1386 = vmatpush1.msra.mxu0 %v1351
      %1387 = vmatprep.subr.mxu0 0.0
      %1388 = vmatpush2.msra.mxu0 0.0
      %1389 = vmatprep.subr.mxu0 0.0
      %1390 = vmatpush2.msra.mxu0 0.0
      %1391 = vmatprep.subr.mxu0 0.0
      %1392 = vmatpush2.msra.mxu0 0.0
      %1393 = vmatprep.subr.mxu0 0.0
      %1394 = vmatpush2.msra.mxu0 0.0
      %1395 = vmatprep.subr.mxu0 0.0
      %1396 = vmatpush2.msra.mxu0 0.0
      %1397 = vmatprep.subr.mxu0 0.0
      %1398 = vmatpush2.msra.mxu0 0.0
      %1399 = vmatprep.subr.mxu0 0.0
      %1400 = vmatpush2.msra.mxu0 0.0
      %1401 = vmatprep.subr.mxu0 0.0
      %1402 = vmatpush2.msra.mxu0 0.0
      %1403 = vmatprep.subr.mxu0 0.0
      %1404 = vmatpush2.msra.mxu0 0.0
      %1405 = vmatprep.subr.mxu0 0.0
      %1406 = vmatpush2.msra.mxu0 0.0
      %1407 = vmatprep.subr.mxu0 0.0
      %1408 = vmatpush2.msra.mxu0 0.0
      %1409 = vmatprep.subr.mxu0 0.0
      %1410 = vmatpush2.msra.mxu0 0.0
      %1411 = vmatprep.subr.mxu0 0.0
      %1412 = vmatpush2.msra.mxu0 0.0
      %1413 = vmatprep.subr.mxu0 0.0
      %1414 = vmatpush2.msra.mxu0 0.0
      %1415 = vmatprep.subr.mxu0 0.0
      %1416 = vmatpush2.msra.mxu0 0.0
      %1417 = vmatprep.subr.mxu0 0.0
      %1418 = vmatpush2.msra.mxu0 0.0
      %1419 = vmatprep.mubr.f32.mxu0 0.0
      %1420 = vmatmul.mubr.f32.gmra.mxu0 %v1349
      %v1421 = vpop.f32.mrf.mxu0
      %v1422 = vadd.f32 0.0, %v1421
      %v1423 = vpop.f32.mrf.mxu0
      %v1424 = vadd.f32 0.0, %v1423
      %1425 = vdwg.mxu0
      %v1426 = vadd.f32 %v1310, %v1422
      %v1427 = vadd.f32 %v1311, %v1424
      %v1428 = vld [vmem:[%s4] sm:$0xf]
      %1430 = vset.pattern.permute.xlu0 0
      %1431 = vperm.xlu0 %1430, %v1428
      %v1432 = vpop.permute.xlu0 %1431
      %v1434 = vadd.f32 %v1426, %v1432
      %v1435 = vadd.f32 %v1427, %v1432
      %v1436 = vmax.f32 %v1434, 0.0
      %v1437 = vmax.f32 %v1435, 0.0
      %v1438 = vld [vmem:[%s5] sm:$0xff]
      %v1439 = vld [vmem:[%s5 + $0x8] sm:$0xff]
      %v1440 = vld [vmem:[%s6] sm:$0xff]
      %v1441 = vld [vmem:[%s6 + $0x8] sm:$0xff]
      %1443 = vset.pattern.permute.xlu0 0
      %1444 = vperm.xlu0 %1443, %v1440
      %v1445 = vpop.permute.xlu0 %1444
      %1448 = vset.pattern.permute.xlu0 0
      %1449 = vperm.xlu0 %1448, %v1441
      %v1450 = vpop.permute.xlu0 %1449
      %v1453 = vsel %vm458, %v1438, 0
      %v1456 = vsel %vm458, %v1439, 0
      %v1459 = vsel %vm462, %v1436, 0
      %v1462 = vsel %vm462, %v1437, 0
      %1464 = vmatprep.subr.mxu0 0.0
      %1465 = vmatpush1.msra.mxu0 0.0
      %1466 = vmatprep.subr.mxu0 0.0
      %1467 = vmatpush1.msra.mxu0 0.0
      %1468 = vmatprep.subr.mxu0 0.0
      %1469 = vmatpush1.msra.mxu0 0.0
      %1470 = vmatprep.subr.mxu0 0.0
      %1471 = vmatpush1.msra.mxu0 0.0
      %1472 = vmatprep.subr.mxu0 0.0
      %1473 = vmatpush1.msra.mxu0 0.0
      %1474 = vmatprep.subr.mxu0 0.0
      %1475 = vmatpush1.msra.mxu0 0.0
      %1476 = vmatprep.subr.mxu0 0.0
      %1477 = vmatpush1.msra.mxu0 0.0
      %1478 = vmatprep.subr.mxu0 0.0
      %1479 = vmatpush1.msra.mxu0 0.0
      %1480 = vmatprep.subr.mxu0 0.0
      %1481 = vmatpush1.msra.mxu0 0.0
      %1482 = vmatprep.subr.mxu0 0.0
      %1483 = vmatpush1.msra.mxu0 0.0
      %1484 = vmatprep.subr.mxu0 0.0
      %1485 = vmatpush1.msra.mxu0 0.0
      %1486 = vmatprep.subr.mxu0 0.0
      %1487 = vmatpush1.msra.mxu0 0.0
      %1488 = vmatprep.subr.mxu0 0.0
      %1489 = vmatpush1.msra.mxu0 0.0
      %1490 = vmatprep.subr.mxu0 0.0
      %1491 = vmatpush1.msra.mxu0 0.0
      %1492 = vmatprep.subr.mxu0 0.0
      %1493 = vmatpush1.msra.mxu0 0.0
      %1494 = vmatprep.subr.mxu0 %v1462
      %1495 = vmatpush1.msra.mxu0 %v1459
      %1496 = vmatprep.subr.mxu0 0.0
      %1497 = vmatpush2.msra.mxu0 0.0
      %1498 = vmatprep.subr.mxu0 0.0
      %1499 = vmatpush2.msra.mxu0 0.0
      %1500 = vmatprep.subr.mxu0 0.0
      %1501 = vmatpush2.msra.mxu0 0.0
      %1502 = vmatprep.subr.mxu0 0.0
      %1503 = vmatpush2.msra.mxu0 0.0
      %1504 = vmatprep.subr.mxu0 0.0
      %1505 = vmatpush2.msra.mxu0 0.0
      %1506 = vmatprep.subr.mxu0 0.0
      %1507 = vmatpush2.msra.mxu0 0.0
      %1508 = vmatprep.subr.mxu0 0.0
      %1509 = vmatpush2.msra.mxu0 0.0
      %1510 = vmatprep.subr.mxu0 0.0
      %1511 = vmatpush2.msra.mxu0 0.0
      %1512 = vmatprep.subr.mxu0 0.0
      %1513 = vmatpush2.msra.mxu0 0.0
      %1514 = vmatprep.subr.mxu0 0.0
      %1515 = vmatpush2.msra.mxu0 0.0
      %1516 = vmatprep.subr.mxu0 0.0
      %1517 = vmatpush2.msra.mxu0 0.0
      %1518 = vmatprep.subr.mxu0 0.0
      %1519 = vmatpush2.msra.mxu0 0.0
      %1520 = vmatprep.subr.mxu0 0.0
      %1521 = vmatpush2.msra.mxu0 0.0
      %1522 = vmatprep.subr.mxu0 0.0
      %1523 = vmatpush2.msra.mxu0 0.0
      %1524 = vmatprep.subr.mxu0 0.0
      %1525 = vmatpush2.msra.mxu0 0.0
      %1526 = vmatprep.subr.mxu0 0.0
      %1527 = vmatpush2.msra.mxu0 0.0
      %1528 = vmatprep.mubr.f32.mxu0 0.0
      %1529 = vmatmul.mubr.f32.gmra.mxu0 %v1453
      %v1530 = vpop.f32.mrf.mxu0
      %v1531 = vadd.f32 %v1445, %v1530
      %v1532 = vpop.f32.mrf.mxu0
      %v1533 = vadd.f32 %v1445, %v1532
      %1534 = vmatprep.mubr.f32.mxu0 0.0
      %1535 = vmatmul.mubr.f32.gmra.mxu0 %v1456
      %v1536 = vpop.f32.mrf.mxu0
      %v1537 = vadd.f32 %v1450, %v1536
      %v1538 = vpop.f32.mrf.mxu0
      %v1539 = vadd.f32 %v1450, %v1538
      %1540 = vdwg.mxu0
      %v1541 = vadd.f32 %v1531, %v306
      %v1542 = vadd.f32 %v1533, %v307
      %v1543 = vadd.f32 %v1537, %v308
      %v1544 = vadd.f32 %v1539, %v309
      %v1545 = vmax.f32 %v1541, 0.0
      %v1546 = vmax.f32 %v1542, 0.0
      %v1547 = vmax.f32 %v1543, 0.0
      %v1548 = vmax.f32 %v1544, 0.0
      %1549 = vst [vmem:[%s305] sm:$0xff] %v1545
      %1550 = vst [vmem:[%s305 + $0x8] sm:$0xff] %v1546
      %1551 = vst [vmem:[%s305 + $0x10] sm:$0xff] %v1547
      %1552 = vst [vmem:[%s305 + $0x18] sm:$0xff] %v1548
      %p1553 = scmp.lt.s32.totalorder %s19, 1
      %s1554 = scalar_select %p1553, %s19, 1
      %s1555 = smul.addr %s1554, 4
      %s1556 = smul.addr %s1555, 8
      %s1557 = scalar_lea.vmem %s8, %s1556
      // Predicated region
      $region53: #{med_conv_block_forward.1} parent=51 // pred_check
        %p1558 = pneg %p210
      $region54: #{med_conv_block_forward.1} parent=51 // pred_check_branch
        %1560 = sbr.rel (%p1558) target = $region56
      $region55: #{med_conv_block_forward.1} parent=51 // pred_region
        _
      $region56: #{med_conv_block_forward.1} parent=51 // pred_fallthru
        _
    $region52: #{med_conv_block_forward.1} parent=5 // pred_fallthru
      _
    %p1561 = scmp.le.s32.totalorder 2, %s14
    // Predicated region
    $region57: #{med_conv_block_forward.1} parent=5 // pred_check
      %p1562 = pneg %p1561
    $region58: #{med_conv_block_forward.1} parent=5 // pred_check_branch
      %1564 = sbr.rel (%p1562) target = $region60
    $region59: #{med_conv_block_forward.1} parent=5 // pred_region
      %s1565 = ssub.s32 %s14, 2
      // Predicated region
      $region61: #{med_conv_block_forward.1} parent=59 // pred_check
        %p1566 = pneg %p216
      $region62: #{med_conv_block_forward.1} parent=59 // pred_check_branch
        %1568 = sbr.rel (%p1566) target = $region64
      $region63: #{med_conv_block_forward.1} parent=59 // pred_region
        %p1569 = scmp.lt.s32.totalorder %s20, 1
        %s1570 = scalar_select %p1569, %s20, 1
        %s1571 = smul.addr %s1570, 4
        %s1572 = smul.addr %s1571, 8
        %s1573 = scalar_lea.vmem %s8, %s1572
      $region64: #{med_conv_block_forward.1} parent=59 // pred_fallthru
        _
    $region60: #{med_conv_block_forward.1} parent=5 // pred_fallthru
      _
  $region6: #{med_conv_block_forward.1} parent=0 // loop_footer
    %s18 = sadd.s32 1, %s14
  $region7: #{med_conv_block_forward.1} parent=0 // loop_footer_branch
    %13 = sbr.rel target = $region3
  $region8: #{med_conv_block_forward.1} parent=0 // loop_exit
    _

</llo_original>
